<compile_context>
chip_gen: v6e
topology: v6e:2x2x1
jax: 0.10.0
libtpu: 0.0.40
codegen_flags: <defaults>
</compile_context>

<pallas_src>
import functools
import math

import jax
import jax.numpy as jnp
from jax.experimental import pallas as pl
from jax.experimental.pallas import tpu as pltpu


# ------------------------------ helpers ------------------------------------ #

def _round_up(x, m):
    return (x + m - 1) // m * m


def _cdiv(a, b):
    return (a + b - 1) // b


def _vmem_budget():
    """Chip-aware VMEM working-set budget + scoped vmem limit."""
    cap = 64 * 1024 * 1024                     # conservative default (v7x per-TC VMEM)
    try:
        cap = int(pltpu.get_tpu_info().vmem_capacity_bytes)
    except Exception:
        pass
    budget = max(24 * 1024 * 1024, cap // 2 - 8 * 1024 * 1024)   # v7x: 24 MiB, v5e/v6e: ~56 MiB
    limit = min(int(cap * 0.75), 100 * 1024 * 1024)              # v7x: 48 MiB, v5e/v6e: ~96 MiB
    return budget, limit


# ----------------------------- Pallas kernels ------------------------------ #

def conv_stats_kernel(a_ref, w_ref, out_ref, psum_ref, psq_ref):
    """K untiled fast path: out = A @ W written straight to the (bf16) output block; per-tile
    channel sum / sum-of-squares taken from the f32 MXU result (exact BN statistics)."""
    y = jnp.dot(a_ref[...], w_ref[...], preferred_element_type=jnp.float32)
    out_ref[...] = y.astype(out_ref.dtype)
    psum_ref[...] = jnp.broadcast_to(jnp.sum(y, axis=0, keepdims=True), psum_ref.shape)
    psq_ref[...] = jnp.broadcast_to(jnp.sum(y * y, axis=0, keepdims=True), psq_ref.shape)


def conv_stats_kernel_ktiled(a_ref, w_ref, out_ref, psum_ref, psq_ref, acc_ref):
    """K-tiled path: f32 accumulator scratch across the (last, "arbitrary") K grid axis."""
    kk = pl.program_id(2)

    @pl.when(kk == 0)
    def _():
        acc_ref[...] = jnp.zeros_like(acc_ref)

    acc_ref[...] += jnp.dot(a_ref[...], w_ref[...], preferred_element_type=jnp.float32)

    @pl.when(kk == pl.num_programs(2) - 1)
    def _():
        y = acc_ref[...]
        out_ref[...] = y.astype(out_ref.dtype)
        psum_ref[...] = jnp.broadcast_to(jnp.sum(y, axis=0, keepdims=True), psum_ref.shape)
        psq_ref[...] = jnp.broadcast_to(jnp.sum(y * y, axis=0, keepdims=True), psq_ref.shape)


def scale_shift_relu_kernel(y_ref, scale_ref, shift_ref, o_ref, *, use_relu):
    """Elementwise epilogue: f32(y_bf16) * scale + shift (+ ReLU); row-major output."""
    y = y_ref[...].astype(jnp.float32) * scale_ref[...] + shift_ref[...]
    if use_relu:
        y = jnp.maximum(y, 0.0)
    o_ref[...] = y


def scale_shift_relu_nchw_kernel(y_ref, scale_ref, shift_ref, o_ref, *, use_relu, o_keep):
    """Epilogue that also transposes its tile to channel-major, so the NCHW result is written
    directly (removes the trailing XLA transpose pass over the output)."""
    y = y_ref[...].astype(jnp.float32) * scale_ref[...] + shift_ref[...]
    if use_relu:
        y = jnp.maximum(y, 0.0)
    o_ref[0, :, :] = jnp.transpose(y)[:o_keep, :]


# ------------------------------ patch builder ------------------------------ #

def _build_patches(x, kh, kw, stride, padding, dilation):
    """x: (N, C, H, W) f32 -> bf16 (N*OH*OW, C*KH*KW) im2col rows.
    Column order (c, kh, kw) matches PyTorch's (O, C, KH, KW) weight layout."""
    n, c, h, w = x.shape
    oh = (h + 2 * padding - dilation * (kh - 1) - 1) // stride + 1
    ow = (w + 2 * padding - dilation * (kw - 1) - 1) // stride + 1
    if kh == 1 and kw == 1 and padding == 0:
        # 1x1 conv: no im2col expansion at all, just NHWC reshape of (optionally strided) x.
        xs = x if stride == 1 else x[:, :, ::stride, ::stride]
        return (xs.astype(jnp.bfloat16).transpose(0, 2, 3, 1).reshape(n * oh * ow, c),
                oh, ow)
    # TODO(synk): generic KxK patches are still materialized in HBM (KH*KW-fold expansion);
    #             fusing this gather into kernel 1 is the remaining big traffic win.
    xp = jnp.pad(x.astype(jnp.bfloat16),
                 ((0, 0), (0, 0), (padding, padding), (padding, padding)))
    cols = []
    for i in range(kh):
        for j in range(kw):
            cols.append(xp[:, :,
                           i * dilation: i * dilation + (oh - 1) * stride + 1: stride,
                           j * dilation: j * dilation + (ow - 1) * stride + 1: stride])
    col = jnp.stack(cols, axis=2)                         # (N, C, KH*KW, OH, OW)
    col = col.transpose(0, 3, 4, 1, 2).reshape(n * oh * ow, c * kh * kw)
    return col, oh, ow


# ------------------------------ tile selection ------------------------------ #

def _pick_matmul_tiles(m, k, o, budget):
    o_pad = _round_up(o, 128)
    tn = 256 if o_pad % 256 == 0 else 128          # 256-wide output tiles for v6e/v7x MXU
    n_oc = o_pad // tn

    # K padding: full 128-alignment when the inflation of the (HBM-streamed) patch matrix is
    # small; otherwise only 16 (bf16 sublane pairs) so we don't blow up the dominant A stream.
    k128 = _round_up(k, 128)
    k_pad = k128 if (k128 - k) * 4 <= k else _round_up(max(k, 16), 16)

    def fits(tm, tk, with_acc):
        a = tm * tk * 2 * 2                        # bf16 patches, double buffered
        w = tk * tn * 2 * 2                        # bf16 weights, double buffered
        ob = tm * tn * 2 * 2                       # bf16 conv out, double buffered
        st = 8 * tn * 4 * 2 * 2                    # psum + psq blocks
        acc = tm * tn * 4 if with_acc else 0       # f32 accumulator scratch
        return a + w + ob + st + acc <= budget

    tm_cands = (2048, 1536, 1024, 768, 512, 256, 128, 64, 32, 16, 8)

    # Prefer K untiled: no accumulator scratch, and the weight block is grid-constant per oc.
    tm_cap, tk, n_k = None, k_pad, 1
    for t in tm_cands:
        if fits(t, k_pad, with_acc=False):
            tm_cap = t
            break
    if tm_cap is None or tm_cap < 256:
        # K too large for an untiled contraction at MXU-friendly tm -> tile K.
        tk = 512
        k_pad = _round_up(k, tk)
        n_k = k_pad // tk
        tm_cap = None
        for t in tm_cands:
            if fits(t, tk, with_acc=True):
                tm_cap = t
                break
        if tm_cap is None:
            tm_cap = 256
    tm_cap = max(tm_cap, 8)

    # Pick the number of M tiles first, then balance tm (avoids up-to-2x padding waste);
    # use >= 2 tiles when possible so both v7x TensorCores get work on the "parallel" M axis.
    if m <= tm_cap:
        n_m = 2 if m >= 512 else 1
    else:
        n_m = _cdiv(m, tm_cap)
    tm = _round_up(_cdiv(m, n_m), 8)
    m_pad = n_m * tm
    return dict(tm=tm, m_pad=m_pad, n_m=n_m, tk=tk, k_pad=k_pad, n_k=n_k,
                o_pad=o_pad, tn=tn, n_oc=n_oc)


def _pick_epilogue_rows(tm, n_m, o_pad, budget):
    """Largest multiple of tm dividing m_pad whose (bf16 in + f32 out, double-buffered)
    working set fits the budget (epilogue is pure HBM-bound -> big lane-dense blocks)."""
    for d in range(n_m, 0, -1):
        if n_m % d:
            continue
        rows = tm * d
        if rows * o_pad * (2 + 4) * 2 <= budget:
            return rows
    return tm


def _pick_nchw_rows(ohw, o_keep, o_pad, budget):
    """Largest 128-multiple divisor of OH*OW whose working set fits the budget."""
    q = ohw // 128
    for d in range(q, 0, -1):
        if q % d:
            continue
        rows = 128 * d
        if rows * o_pad * 2 * 2 + o_keep * rows * 4 * 2 + 4 * o_pad * 4 * 2 <= budget:
            return rows
    return 128


# ------------------------------ JAX wrapper -------------------------------- #

@functools.partial(jax.jit,
                   static_argnames=("stride", "padding", "dilation",
                                    "relu", "bn", "eps"))
def basic_conv_forward(x, weight, gamma, beta, conv_bias=None, *,
                       stride=1, padding=0, dilation=1,
                       relu=True, bn=True, eps=1e-5):
    """BasicConv forward: Conv2d (groups=1) + BatchNorm2d (training-mode batch stats) + ReLU.
    x: NCHW, weight: (O, C, KH, KW). Returns NCHW float32."""
    # TODO(synk): grouped convolution (groups > 1) not implemented (module default is 1).
    n, c_in, h, w = x.shape
    o, c_w, kh, kw = weight.shape
    assert c_w == c_in, "groups != 1 not supported"

    budget, vmem_limit = _vmem_budget()

    patches, oh, ow = _build_patches(x, kh, kw, stride, padding, dilation)
    m, k = patches.shape
    t = _pick_matmul_tiles(m, k, o, budget)
    tm, m_pad, n_m = t["tm"], t["m_pad"], t["n_m"]
    tk, k_pad, n_k = t["tk"], t["k_pad"], t["n_k"]
    o_pad, tn, n_oc = t["o_pad"], t["tn"], t["n_oc"]

    # Zero padding: padded rows/cols contribute 0 to the matmul and 0 to the channel stats.
    # A conv bias (if any) cancels exactly under batch-stat BN, so it is folded into `shift`.
    patches = jnp.pad(patches, ((0, m_pad - m), (0, k_pad - k)))
    w_mat = jnp.pad(weight.astype(jnp.bfloat16).reshape(o, c_in * kh * kw).T,
                    ((0, k_pad - k), (0, o_pad - o)))                    # (K_pad, O_pad)

    out_shapes = (
        jax.ShapeDtypeStruct((m_pad, o_pad), jnp.bfloat16),    # bf16 conv intermediate
        jax.ShapeDtypeStruct((n_m * 8, o_pad), jnp.float32),   # per-tile channel sums
        jax.ShapeDtypeStruct((n_m * 8, o_pad), jnp.float32),   # per-tile channel sum-of-squares
    )

    # --- Kernel 1: MXU matmul (bf16 feeds, f32 accumulate) + fused channel stats ---
    if n_k == 1:
        grid_spec = pltpu.PrefetchScalarGridSpec(
            num_scalar_prefetch=0,
            grid=(n_m, n_oc),
            in_specs=[
                pl.BlockSpec((tm, k_pad), lambda i, j: (i, 0)),
                pl.BlockSpec((k_pad, tn), lambda i, j: (0, j)),
            ],
            out_specs=[
                pl.BlockSpec((tm, tn), lambda i, j: (i, j)),
                pl.BlockSpec((8, tn), lambda i, j: (i, j)),
                pl.BlockSpec((8, tn), lambda i, j: (i, j)),
            ],
        )
        kernel1 = conv_stats_kernel
        dims = ("parallel", "parallel")
    else:
        grid_spec = pltpu.PrefetchScalarGridSpec(
            num_scalar_prefetch=0,
            grid=(n_m, n_oc, n_k),
            in_specs=[
                pl.BlockSpec((tm, tk), lambda i, j, kk: (i, kk)),
                pl.BlockSpec((tk, tn), lambda i, j, kk: (kk, j)),
            ],
            out_specs=[
                pl.BlockSpec((tm, tn), lambda i, j, kk: (i, j)),
                pl.BlockSpec((8, tn), lambda i, j, kk: (i, j)),
                pl.BlockSpec((8, tn), lambda i, j, kk: (i, j)),
            ],
            scratch_shapes=[pltpu.VMEM((tm, tn), jnp.float32)],
        )
        kernel1 = conv_stats_kernel_ktiled
        dims = ("parallel", "parallel", "arbitrary")

    conv_out, psum, psq = pl.pallas_call(
        kernel1,
        out_shape=out_shapes,
        grid_spec=grid_spec,
        compiler_params=pltpu.CompilerParams(
            dimension_semantics=dims, vmem_limit_bytes=vmem_limit),
    )(patches, w_mat)

    # --- Tiny per-channel math in XLA: batch stats -> scale/shift ---
    if bn:
        ch_sum = jnp.sum(psum.reshape(n_m, 8, o_pad)[:, 0, :], axis=0)
        ch_sq = jnp.sum(psq.reshape(n_m, 8, o_pad)[:, 0, :], axis=0)
        mean = ch_sum / m                                   # true M (padded rows are zero)
        # NOTE: single-pass E[y^2]-mean^2 in f32 (clamped >= 0); adequate for conv+BN
        # magnitudes but not a Welford-grade estimator for extreme channel means.
        var = jnp.maximum(ch_sq / m - mean * mean, 0.0)
        inv_std = jax.lax.rsqrt(var + eps)
        g = jnp.pad(gamma.astype(jnp.float32), (0, o_pad - o))
        b = jnp.pad(beta.astype(jnp.float32), (0, o_pad - o))
        scale = g * inv_std
        shift = b - mean * scale        # conv bias (if any) cancels exactly under batch BN
    else:
        scale = jnp.ones((o_pad,), jnp.float32)
        shift = (jnp.zeros((o_pad,), jnp.float32) if conv_bias is None
                 else jnp.pad(conv_bias.astype(jnp.float32), (0, o_pad - o)))
    scale = scale.reshape(1, o_pad)
    shift = shift.reshape(1, o_pad)

    ohw = oh * ow
    if ohw % 128 == 0:
        # --- Kernel 2 (layout-fused): scale/shift + ReLU + in-tile transpose, writing the
        # channel-major (NCHW) result directly -> no trailing XLA transpose pass.
        o_keep = _round_up(o, 8)
        rows = _pick_nchw_rows(ohw, o_keep, o_pad, budget)
        s_per_img = ohw // rows
        kernel2 = functools.partial(scale_shift_relu_nchw_kernel,
                                    use_relu=relu, o_keep=o_keep)
        y = pl.pallas_call(
            kernel2,
            out_shape=jax.ShapeDtypeStruct((n, o_keep, ohw), jnp.float32),
            grid_spec=pltpu.PrefetchScalarGridSpec(
                num_scalar_prefetch=0,
                grid=(n, s_per_img),
                in_specs=[
                    pl.BlockSpec((rows, o_pad), lambda bi, si: (bi * s_per_img + si, 0)),
                    pl.BlockSpec((1, o_pad), lambda bi, si: (0, 0)),
                    pl.BlockSpec((1, o_pad), lambda bi, si: (0, 0)),
                ],
                out_specs=pl.BlockSpec((1, o_keep, rows), lambda bi, si: (bi, 0, si)),
            ),
            compiler_params=pltpu.CompilerParams(
                dimension_semantics=("parallel", "parallel"),
                vmem_limit_bytes=vmem_limit),
        )(conv_out, scale, shift)
        if o_keep != o:
            y = y[:, :o, :]
        return y.reshape(n, o, oh, ow)

    # --- Kernel 2 (fallback): scale/shift + ReLU over the row-major conv buffer ---
    rows = _pick_epilogue_rows(tm, n_m, o_pad, budget)
    kernel2 = functools.partial(scale_shift_relu_kernel, use_relu=relu)
    y = pl.pallas_call(
        kernel2,
        out_shape=jax.ShapeDtypeStruct((m_pad, o_pad), jnp.float32),
        grid_spec=pltpu.PrefetchScalarGridSpec(
            num_scalar_prefetch=0,
            grid=(m_pad // rows,),
            in_specs=[
                pl.BlockSpec((rows, o_pad), lambda i: (i, 0)),
                pl.BlockSpec((1, o_pad), lambda i: (0, 0)),
                pl.BlockSpec((1, o_pad), lambda i: (0, 0)),
            ],
            out_specs=pl.BlockSpec((rows, o_pad), lambda i: (i, 0)),
        ),
        compiler_params=pltpu.CompilerParams(
            dimension_semantics=("parallel",), vmem_limit_bytes=vmem_limit),
    )(conv_out, scale, shift)
    # TODO(synk): this path still pays an XLA NCHW transpose (only hit when OH*OW % 128 != 0).
    return y[:m, :o].reshape(n, oh, ow, o).transpose(0, 3, 1, 2)


# ------------------------------- reference --------------------------------- #

def _reference(x, weight, gamma, beta, stride, padding, dilation, relu, bn, eps=1e-5):
    y = jax.lax.conv_general_dilated(
        x.astype(jnp.float32), weight.astype(jnp.float32),
        window_strides=(stride, stride),
        padding=[(padding, padding), (padding, padding)],
        rhs_dilation=(dilation, dilation),
        dimension_numbers=("NCHW", "OIHW", "NCHW"))
    if bn:
        mean = jnp.mean(y, axis=(0, 2, 3), keepdims=True)
        var = jnp.mean((y - mean) ** 2, axis=(0, 2, 3), keepdims=True)
        y = (y - mean) * jax.lax.rsqrt(var + eps) * gamma.reshape(1, -1, 1, 1) \
            + beta.reshape(1, -1, 1, 1)
    if relu:
        y = jnp.maximum(y, 0.0)
    return y


# --------------------------------- main ------------------------------------ #

if __name__ == "__main__":
    # BasicConv(in_planes=4, out_planes=8, kernel_size=3, stride=1, padding=1)
    N, C_in, H, W = 2, 4, 16, 16
    C_out, KH, KW = 8, 3, 3
    stride, padding, dilation = 1, 1, 1

    key = jax.random.PRNGKey(0)
    kx, kw_ = jax.random.split(key)
    x = jax.random.normal(kx, (N, C_in, H, W), dtype=jnp.float32)

    # Deterministic parameter init (kaiming-uniform-like bound, as in nn.Conv2d).
    fan_in = C_in * KH * KW
    bound = 1.0 / math.sqrt(fan_in)
    weight = jax.random.uniform(kw_, (C_out, C_in, KH, KW),
                                minval=-bound, maxval=bound, dtype=jnp.float32)
    gamma = jnp.ones((C_out,), jnp.float32)    # BatchNorm weight
    beta = jnp.zeros((C_out,), jnp.float32)    # BatchNorm bias
    # conv bias=False (module default)

    out = basic_conv_forward(x, weight, gamma, beta, conv_bias=None,
                             stride=stride, padding=padding, dilation=dilation,
                             relu=True, bn=True)
    out = jax.block_until_ready(out)

    # Reference on bf16-quantized inputs (kernel feeds the MXU in bf16, f32 accumulate). The
    # conv result is additionally stored as bf16 between the two kernels (<= 1 bf16 ulp, i.e.
    # ~0.4% of the pre-BN magnitude, ~0.015 after normalization), so compare with a tolerance
    # that covers that rounding.
    x_q = x.astype(jnp.bfloat16).astype(jnp.float32)
    w_q = weight.astype(jnp.bfloat16).astype(jnp.float32)
    ref = _reference(x_q, w_q, gamma, beta, stride, padding, dilation,
                     relu=True, bn=True)

    assert out.shape == (N, C_out, H, W), out.shape
    assert jnp.allclose(out, ref, rtol=3e-2, atol=3e-2), \
        float(jnp.max(jnp.abs(out - ref)))

    print("KERNEL_OK")
</pallas_src>

<mosaic_0001>
module attributes {stable_mosaic.version = 11 : i64} {
  func.func @conv_stats_kernel(%arg0: i32, %arg1: i32, %arg2: memref<256x48xbf16, #tpu.memory_space<vmem>>, %arg3: memref<48x128xbf16, #tpu.memory_space<vmem>>, %arg4: memref<256x128xbf16, #tpu.memory_space<vmem>>, %arg5: memref<8x128xf32, #tpu.memory_space<vmem>>, %arg6: memref<8x128xf32, #tpu.memory_space<vmem>>) attributes {dimension_semantics = [#tpu.dimension_semantics<parallel>, #tpu.dimension_semantics<parallel>], iteration_bounds = array<i64: 2, 1>, scalar_prefetch = 0 : i64, scratch_operands = 0 : i64, tpu.core_type = #tpu.core_type<tc>, window_params = [{transform_indices = @transform_0, window_bounds = array<i64: 256, 48>}, {transform_indices = @transform_1, window_bounds = array<i64: 48, 128>}, {transform_indices = @transform_2, window_bounds = array<i64: 256, 128>}, {transform_indices = @transform_3, window_bounds = array<i64: 8, 128>}, {transform_indices = @transform_4, window_bounds = array<i64: 8, 128>}]} {
    %c0 = arith.constant 0 : index
    %c0_0 = arith.constant 0 : index
    %0 = vector.load %arg2[%c0, %c0_0] : memref<256x48xbf16, #tpu.memory_space<vmem>>, vector<256x48xbf16>
    %c0_1 = arith.constant 0 : index
    %c0_2 = arith.constant 0 : index
    %1 = vector.load %arg3[%c0_1, %c0_2] : memref<48x128xbf16, #tpu.memory_space<vmem>>, vector<48x128xbf16>
    %cst = arith.constant dense<0.000000e+00> : vector<256x128xf32>
    %2 = tpu.matmul %0, %1, %cst {dimension_numbers = #tpu.dot_dimension_numbers<[1], [0], [0], [1], [0, 0, 1, 1], [], []>} : vector<256x48xbf16>, vector<48x128xbf16>, vector<256x128xf32> -> vector<256x128xf32>
    %3 = arith.truncf %2 : vector<256x128xf32> to vector<256x128xbf16>
    %c0_3 = arith.constant 0 : index
    %c0_4 = arith.constant 0 : index
    %4 = vector.load %arg4[%c0_3, %c0_4] : memref<256x128xbf16, #tpu.memory_space<vmem>>, vector<256x128xbf16>
    tpu.vector_store %arg4[%c0_3, %c0_4], %3 {strides = array<i32>} : memref<256x128xbf16, #tpu.memory_space<vmem>>, vector<256x128xbf16>,
    %cst_5 = arith.constant dense<0.000000e+00> : vector<128xf32>
    %5 = vector.multi_reduction <add>, %2, %cst_5 [0] : vector<256x128xf32> to vector<128xf32>
    %6 = vector.shape_cast %5 : vector<128xf32> to vector<1x128xf32>
    %7 = vector.shape_cast %6 : vector<1x128xf32> to vector<1x128xf32>
    %8 = vector.broadcast %7 : vector<1x128xf32> to vector<8x128xf32>
    %c0_6 = arith.constant 0 : index
    %c0_7 = arith.constant 0 : index
    %9 = vector.load %arg5[%c0_6, %c0_7] : memref<8x128xf32, #tpu.memory_space<vmem>>, vector<8x128xf32>
    tpu.vector_store %arg5[%c0_6, %c0_7], %8 {strides = array<i32>} : memref<8x128xf32, #tpu.memory_space<vmem>>, vector<8x128xf32>,
    %10 = arith.mulf %2, %2 : vector<256x128xf32>
    %cst_8 = arith.constant dense<0.000000e+00> : vector<128xf32>
    %11 = vector.multi_reduction <add>, %10, %cst_8 [0] : vector<256x128xf32> to vector<128xf32>
    %12 = vector.shape_cast %11 : vector<128xf32> to vector<1x128xf32>
    %13 = vector.shape_cast %12 : vector<1x128xf32> to vector<1x128xf32>
    %14 = vector.broadcast %13 : vector<1x128xf32> to vector<8x128xf32>
    %c0_9 = arith.constant 0 : index
    %c0_10 = arith.constant 0 : index
    %15 = vector.load %arg6[%c0_9, %c0_10] : memref<8x128xf32, #tpu.memory_space<vmem>>, vector<8x128xf32>
    tpu.vector_store %arg6[%c0_9, %c0_10], %14 {strides = array<i32>} : memref<8x128xf32, #tpu.memory_space<vmem>>, vector<8x128xf32>,
    return
  }
  func.func @transform_0(%arg0: i32, %arg1: i32) -> (i32, i32) {
    %c0_i32 = arith.constant 0 : i32
    %c0_i32_0 = arith.constant 0 : i32
    return %arg0, %c0_i32 : i32, i32
  }
  func.func @transform_1(%arg0: i32, %arg1: i32) -> (i32, i32) {
    %c0_i32 = arith.constant 0 : i32
    %c0_i32_0 = arith.constant 0 : i32
    return %c0_i32, %arg1 : i32, i32
  }
  func.func @transform_2(%arg0: i32, %arg1: i32) -> (i32, i32) {
    %c0_i32 = arith.constant 0 : i32
    return %arg0, %arg1 : i32, i32
  }
  func.func @transform_3(%arg0: i32, %arg1: i32) -> (i32, i32) {
    %c0_i32 = arith.constant 0 : i32
    return %arg0, %arg1 : i32, i32
  }
  func.func @transform_4(%arg0: i32, %arg1: i32) -> (i32, i32) {
    %c0_i32 = arith.constant 0 : i32
    return %arg0, %arg1 : i32, i32
  }
}

module attributes {stable_mosaic.version = 11 : i64} {
  func.func @scale_shift_relu_nchw_kernel(%arg0: i32, %arg1: i32, %arg2: memref<256x128xbf16, #tpu.memory_space<vmem>>, %arg3: memref<1x128xf32, #tpu.memory_space<vmem>>, %arg4: memref<1x128xf32, #tpu.memory_space<vmem>>, %arg5: memref<1x8x256xf32, #tpu.memory_space<vmem>>) attributes {dimension_semantics = [#tpu.dimension_semantics<parallel>, #tpu.dimension_semantics<parallel>], iteration_bounds = array<i64: 2, 1>, scalar_prefetch = 0 : i64, scratch_operands = 0 : i64, tpu.core_type = #tpu.core_type<tc>, window_params = [{transform_indices = @transform_0, window_bounds = array<i64: 256, 128>}, {pipeline_mode = #tpu.pipeline_mode<synchronous>, transform_indices = @transform_1, window_bounds = array<i64: 1, 128>}, {pipeline_mode = #tpu.pipeline_mode<synchronous>, transform_indices = @transform_2, window_bounds = array<i64: 1, 128>}, {transform_indices = @transform_3, window_bounds = array<i64: 1, 8, 256>}]} {
    %c0 = arith.constant 0 : index
    %c0_0 = arith.constant 0 : index
    %0 = vector.load %arg2[%c0, %c0_0] : memref<256x128xbf16, #tpu.memory_space<vmem>>, vector<256x128xbf16>
    %1 = arith.extf %0 : vector<256x128xbf16> to vector<256x128xf32>
    %c0_1 = arith.constant 0 : index
    %c0_2 = arith.constant 0 : index
    %2 = vector.load %arg3[%c0_1, %c0_2] : memref<1x128xf32, #tpu.memory_space<vmem>>, vector<1x128xf32>
    %3 = vector.broadcast %2 : vector<1x128xf32> to vector<256x128xf32>
    %4 = arith.mulf %1, %3 : vector<256x128xf32>
    %c0_3 = arith.constant 0 : index
    %c0_4 = arith.constant 0 : index
    %5 = vector.load %arg4[%c0_3, %c0_4] : memref<1x128xf32, #tpu.memory_space<vmem>>, vector<1x128xf32>
    %6 = vector.broadcast %5 : vector<1x128xf32> to vector<256x128xf32>
    %7 = arith.addf %4, %6 : vector<256x128xf32>
    %cst = arith.constant 0.000000e+00 : f32
    %8 = vector.broadcast %cst : f32 to vector<256x128xf32>
    %9 = arith.maximumf %7, %8 : vector<256x128xf32>
    %10 = tpu.transpose %9, [1, 0] : vector<256x128xf32> -> vector<128x256xf32>
    %11 = vector.extract_strided_slice %10 {offsets = [0, 0], sizes = [8, 256], strides = [1, 1]} : vector<128x256xf32> to vector<8x256xf32>
    %c0_5 = arith.constant 0 : index
    %c0_6 = arith.constant 0 : index
    %c0_7 = arith.constant 0 : index
    %12 = vector.load %arg5[%c0_5, %c0_6, %c0_7] : memref<1x8x256xf32, #tpu.memory_space<vmem>>, vector<1x8x256xf32>
    %13 = vector.shape_cast %12 : vector<1x8x256xf32> to vector<8x256xf32>
    %14 = vector.shape_cast %11 : vector<8x256xf32> to vector<1x8x256xf32>
    tpu.vector_store %arg5[%c0_5, %c0_6, %c0_7], %14 {strides = array<i32>} : memref<1x8x256xf32, #tpu.memory_space<vmem>>, vector<1x8x256xf32>,
    return
  }
  func.func @transform_0(%arg0: i32, %arg1: i32) -> (i32, i32) {
    %c1_i32 = arith.constant 1 : i32
    %0 = arith.muli %arg0, %c1_i32 : i32
    %1 = arith.addi %0, %arg1 : i32
    %c0_i32 = arith.constant 0 : i32
    %c0_i32_0 = arith.constant 0 : i32
    return %1, %c0_i32 : i32, i32
  }
  func.func @transform_1(%arg0: i32, %arg1: i32) -> (i32, i32) {
    %c0_i32 = arith.constant 0 : i32
    %c0_i32_0 = arith.constant 0 : i32
    %c0_i32_1 = arith.constant 0 : i32
    return %c0_i32, %c0_i32_0 : i32, i32
  }
  func.func @transform_2(%arg0: i32, %arg1: i32) -> (i32, i32) {
    %c0_i32 = arith.constant 0 : i32
    %c0_i32_0 = arith.constant 0 : i32
    %c0_i32_1 = arith.constant 0 : i32
    return %c0_i32, %c0_i32_0 : i32, i32
  }
  func.func @transform_3(%arg0: i32, %arg1: i32) -> (i32, i32, i32) {
    %c0_i32 = arith.constant 0 : i32
    %c0_i32_0 = arith.constant 0 : i32
    return %arg0, %c0_i32, %arg1 : i32, i32, i32
  }
}

</mosaic_0001>

<llo_original>
// kernel: basic_conv_forward.3
$region0: #{basic_conv_forward.3}
  #allocation0 [shape = 'u32[]', space=smem, size = 0x4, offset = 0x4, fixed_abs, tag = 'smem constant byte address 0x4 - core index']
  #allocation1 [shape = 'u32[144,128]{1,0:T(1,128)}', space=vmem, size = 0x12000, scoped, tag = 'internal scratch']
  %s0 = inlined_call_operand.vmem [shape: bf16[512,128], index: 0, kind: input, shape index: {}]
  %s1 = inlined_call_operand.vmem [shape: f32[1,128], index: 1, kind: input, shape index: {}]
  %s2 = inlined_call_operand.vmem [shape: f32[1,128], index: 2, kind: input, shape index: {}]
  %s3 = inlined_call_operand.vmem [shape: f32[2,8,256], index: 3, kind: output, shape index: {}]
  %s4 = sld [smem:[#allocation0]]
  $region45: #{basic_conv_forward.3} parent=0
    _
  %s6 = ssub.s32 1, %s4
  %s7 = scalar_select 0, %s6, %s4
  loop: start=0, step=1, limit=4
  $region2: #{basic_conv_forward.3} parent=0 // loop_pre_header
    _
  $region3: #{basic_conv_forward.3} parent=0 // loop_header
    %s9 = sphi 0, %s13
    %p10 = scmp.ge.s32.totalorder %s9, 4
    %s16 = sphi 0, %s28
    %s17 = sphi 0, %s24
    %s18 = sphi 0, %s16
    %s19 = sphi 0, %s17
    %s20 = sphi 0, %s18
    %s21 = sphi 0, %s19
    %s33 = sphi 0, %s35
    %s36 = sphi 0, %s33
    %s37 = sphi 0, %s36
    %s53 = sphi 0, %s37
    %s57 = sphi 0, %s57
    %s59 = sphi 0, %s57
    %s60 = sphi 0, %s59
    %s74 = sphi 0, %s60
    %s78 = sphi 0, %s78
    %s80 = sphi 0, %s78
    %s81 = sphi 0, %s80
    %s95 = sphi 0, %s81
    %s103 = sphi 0, %s105
    %s106 = sphi 0, %s103
    %s107 = sphi 0, %s106
    %s123 = sphi 0, %s107
  $region4: #{basic_conv_forward.3} parent=0 // loop_header_branch
    %12 = sbr.rel (%p10) target = $region8
  $region5: #{basic_conv_forward.3} parent=0 // loop_body
    %s14 = ssub.s32 %s9, 1
    %s15 = ssub.s32 %s9, 2
    %s22 = sadd.s32 1, %s17
    %p23 = scmp.ge.s32.totalorder %s22, 1
    %s24 = scalar_select %p23, 0, %s22
    %s25 = sadd.s32 1, %s16
    %s26 = scalar_select %p23, %s25, %s16
    %p27 = scmp.ge.s32.totalorder %s26, 2
    %s28 = scalar_select %p27, 0, %s26
    %s29 = sadd.s32 %s16, %s17
    %s30 = sadd.s32 %s28, %s24
    %s31 = ssub.s32 %s29, %s30
    %p32 = scmp.eq.s32.totalorder %s31, 0
    %s34 = sadd.s32 %s33, 1
    %s35 = scalar_select %p32, %s33, %s34
    %p38 = pneg %p32
    %p39 = scmp.eq.s32.totalorder %s9, 1
    %p40 = por %p38, %p39
    %p41 = scmp.ne.s32.totalorder %s33, %s36
    %p42 = scmp.eq.s32.totalorder %s9, 0
    %p43 = por %p41, %p42
    %p44 = scmp.ne.s32.totalorder %s33, %s36
    %p45 = scmp.eq.s32.totalorder %s14, 1
    %p46 = por %p44, %p45
    %p47 = scmp.ne.s32.totalorder %s36, %s37
    %p48 = scmp.eq.s32.totalorder %s14, 0
    %p49 = por %p47, %p48
    %p50 = scmp.ne.s32.totalorder %s36, %s37
    %p51 = scmp.eq.s32.totalorder %s15, 1
    %p52 = por %p50, %p51
    %p54 = scmp.ne.s32.totalorder %s37, %s53
    %p55 = scmp.eq.s32.totalorder %s15, 0
    %p56 = por %p54, %p55
    %s58 = sadd.s32 %s57, 1
    %p61 = scmp.eq.s32.totalorder %s9, 1
    %p62 = scmp.ne.s32.totalorder %s57, %s59
    %p63 = scmp.eq.s32.totalorder %s9, 0
    %p64 = por %p62, %p63
    %p65 = scmp.ne.s32.totalorder %s57, %s59
    %p66 = scmp.eq.s32.totalorder %s14, 1
    %p67 = por %p65, %p66
    %p68 = scmp.ne.s32.totalorder %s59, %s60
    %p69 = scmp.eq.s32.totalorder %s14, 0
    %p70 = por %p68, %p69
    %p71 = scmp.ne.s32.totalorder %s59, %s60
    %p72 = scmp.eq.s32.totalorder %s15, 1
    %p73 = por %p71, %p72
    %p75 = scmp.ne.s32.totalorder %s60, %s74
    %p76 = scmp.eq.s32.totalorder %s15, 0
    %p77 = por %p75, %p76
    %s79 = sadd.s32 %s78, 1
    %p82 = scmp.eq.s32.totalorder %s9, 1
    %p83 = scmp.ne.s32.totalorder %s78, %s80
    %p84 = scmp.eq.s32.totalorder %s9, 0
    %p85 = por %p83, %p84
    %p86 = scmp.ne.s32.totalorder %s78, %s80
    %p87 = scmp.eq.s32.totalorder %s14, 1
    %p88 = por %p86, %p87
    %p89 = scmp.ne.s32.totalorder %s80, %s81
    %p90 = scmp.eq.s32.totalorder %s14, 0
    %p91 = por %p89, %p90
    %p92 = scmp.ne.s32.totalorder %s80, %s81
    %p93 = scmp.eq.s32.totalorder %s15, 1
    %p94 = por %p92, %p93
    %p96 = scmp.ne.s32.totalorder %s81, %s95
    %p97 = scmp.eq.s32.totalorder %s15, 0
    %p98 = por %p96, %p97
    %s99 = ssub.s32 %s16, %s28
    %s100 = ssub.s32 %s17, %s24
    %s101 = sor.u32 %s99, %s100
    %p102 = scmp.eq.s32.totalorder %s101, 0
    %s104 = sadd.s32 %s103, 1
    %s105 = scalar_select %p102, %s103, %s104
    %p108 = pneg %p102
    %p109 = scmp.eq.s32.totalorder %s9, 1
    %p110 = por %p108, %p109
    %p111 = scmp.ne.s32.totalorder %s103, %s106
    %p112 = scmp.eq.s32.totalorder %s9, 0
    %p113 = por %p111, %p112
    %p114 = scmp.ne.s32.totalorder %s103, %s106
    %p115 = scmp.eq.s32.totalorder %s14, 1
    %p116 = por %p114, %p115
    %p117 = scmp.ne.s32.totalorder %s106, %s107
    %p118 = scmp.eq.s32.totalorder %s14, 0
    %p119 = por %p117, %p118
    %p120 = scmp.ne.s32.totalorder %s106, %s107
    %p121 = scmp.eq.s32.totalorder %s15, 1
    %p122 = por %p120, %p121
    %p124 = scmp.ne.s32.totalorder %s107, %s123
    %p125 = scmp.eq.s32.totalorder %s15, 0
    %p126 = por %p124, %p125
    %p127 = scmp.le.s32.totalorder 1, %s9
    %p128 = scmp.lt.s32.totalorder %s9, 3
    %p129 = pnand %p127, %p128
    %p130 = pneg %p129
    // Predicated region
    $region9: #{basic_conv_forward.3} parent=5 // pred_check
      _
    $region10: #{basic_conv_forward.3} parent=5 // pred_check_branch
      %132 = sbr.rel (%p129) target = $region12
    $region11: #{basic_conv_forward.3} parent=5 // pred_region
      %s133 = ssub.s32 %s9, 1
      // Predicated region
      $region13: #{basic_conv_forward.3} parent=11 // pred_check
        %p134 = pneg %p70
      $region14: #{basic_conv_forward.3} parent=11 // pred_check_branch
        %136 = sbr.rel (%p134) target = $region16
      $region15: #{basic_conv_forward.3} parent=11 // pred_region
        _
      $region16: #{basic_conv_forward.3} parent=11 // pred_fallthru
        _
      // Predicated region
      $region17: #{basic_conv_forward.3} parent=11 // pred_check
        %p137 = pneg %p91
      $region18: #{basic_conv_forward.3} parent=11 // pred_check_branch
        %139 = sbr.rel (%p137) target = $region20
      $region19: #{basic_conv_forward.3} parent=11 // pred_region
        _
      $region20: #{basic_conv_forward.3} parent=11 // pred_fallthru
        _
    $region12: #{basic_conv_forward.3} parent=5 // pred_fallthru
      _
    %p140 = scmp.lt.s32.totalorder %s9, 2
    // Predicated region
    $region21: #{basic_conv_forward.3} parent=5 // pred_check
      %p141 = pneg %p140
    $region22: #{basic_conv_forward.3} parent=5 // pred_check_branch
      %143 = sbr.rel (%p141) target = $region24
    $region23: #{basic_conv_forward.3} parent=5 // pred_region
      // Predicated region
      $region25: #{basic_conv_forward.3} parent=23 // pred_check
        %p144 = pneg %p43
      $region26: #{basic_conv_forward.3} parent=23 // pred_check_branch
        %146 = sbr.rel (%p144) target = $region28
      $region27: #{basic_conv_forward.3} parent=23 // pred_region
        %s147 = sadd.s32 %s16, %s17
        %s148 = smul.u32 32, %s147
        %p149 = scmp.lt.s32.totalorder %s148, 63
        %s150 = scalar_select %p149, %s148, 63
        %s151 = smul.addr %s150, 4
        %s152 = scalar_lea.vmem %s0, %s151
        %s153 = sadd.s32 %s16, %s17
        %s154 = smul.u32 32, %s153
      $region28: #{basic_conv_forward.3} parent=23 // pred_fallthru
        _
    $region24: #{basic_conv_forward.3} parent=5 // pred_fallthru
      _
    %p155 = scmp.le.s32.totalorder 1, %s9
    %p156 = scmp.lt.s32.totalorder %s9, 3
    %p157 = pnand %p155, %p156
    %p158 = pneg %p157
    // Predicated region
    $region29: #{basic_conv_forward.3} parent=5 // pred_check
      _
    $region30: #{basic_conv_forward.3} parent=5 // pred_check_branch
      %160 = sbr.rel (%p157) target = $region32
    $region31: #{basic_conv_forward.3} parent=5 // pred_region
      %s161 = ssub.s32 %s9, 1
      %s162 = sadd.s32 %s18, %s19
      %s163 = smul.u32 32, %s162
      %p164 = scmp.lt.s32.totalorder %s163, 63
      %s165 = scalar_select %p164, %s163, 63
      %s166 = smul.addr %s165, 4
      %s167 = scalar_lea.vmem %s0, %s166
      %p168 = pneg %p49
      %p169 = pneg %p46
      %p170 = pneg %p70
      %p171 = pneg %p67
      %p172 = pneg %p91
      %p173 = pneg %p88
      %p174 = pneg %p119
      %p175 = pneg %p116
      %s176 = smul.u32 2, %s19
      %p177 = scmp.lt.s32.totalorder %s18, 1
      %s178 = scalar_select %p177, %s18, 1
      %p179 = scmp.lt.s32.totalorder %s176, 1
      %s180 = scalar_select %p179, %s176, 1
      %s181 = smul.addr %s178, 2
      %s182 = sadd.s32 %s180, %s181
      %s183 = smul.addr %s182, 8
      %s184 = scalar_lea.vmem %s3, %s183
      %s185 = sadd.s32 %s18, %s19
      %s186 = smul.u32 32, %s185
      %p187 = scmp.lt.s32.totalorder %s186, 63
      %s188 = scalar_select %p187, %s186, 63
      %s189 = smul.addr %s188, 4
      %s190 = scalar_lea.vmem %s0, %s189
      %s191 = sadd.s32 %s18, %s19
      %s192 = smul.u32 32, %s191
      %s193 = smul.u32 2, %s19
      %p194 = scmp.lt.s32.totalorder %s18, 1
      %s195 = scalar_select %p194, %s18, 1
      %p196 = scmp.lt.s32.totalorder %s193, 1
      %s197 = scalar_select %p196, %s193, 1
      %s198 = smul.addr %s195, 2
      %s199 = sadd.s32 %s197, %s198
      %s200 = smul.addr %s199, 8
      %s201 = scalar_lea.vmem %s3, %s200
      %s202 = smul.u32 2, %s19
      %v203 = vld [vmem:[%s190] sm:$0xf]
      %v204 = vld [vmem:[%s190 + $0x4] sm:$0xf]
      %v205 = vld [vmem:[%s190 + $0x8] sm:$0xf]
      %v206 = vld [vmem:[%s190 + $0xc] sm:$0xf]
      %v207 = vld [vmem:[%s190 + $0x10] sm:$0xf]
      %v208 = vld [vmem:[%s190 + $0x14] sm:$0xf]
      %v209 = vld [vmem:[%s190 + $0x18] sm:$0xf]
      %v210 = vld [vmem:[%s190 + $0x1c] sm:$0xf]
      %v211 = vld [vmem:[%s190 + $0x20] sm:$0xf]
      %v212 = vld [vmem:[%s190 + $0x24] sm:$0xf]
      %v213 = vld [vmem:[%s190 + $0x28] sm:$0xf]
      %v214 = vld [vmem:[%s190 + $0x2c] sm:$0xf]
      %v215 = vld [vmem:[%s190 + $0x30] sm:$0xf]
      %v216 = vld [vmem:[%s190 + $0x34] sm:$0xf]
      %v217 = vld [vmem:[%s190 + $0x38] sm:$0xf]
      %v218 = vld [vmem:[%s190 + $0x3c] sm:$0xf]
      %v219 = vld [vmem:[%s190 + $0x40] sm:$0xf]
      %v220 = vld [vmem:[%s190 + $0x44] sm:$0xf]
      %v221 = vld [vmem:[%s190 + $0x48] sm:$0xf]
      %v222 = vld [vmem:[%s190 + $0x4c] sm:$0xf]
      %v223 = vld [vmem:[%s190 + $0x50] sm:$0xf]
      %v224 = vld [vmem:[%s190 + $0x54] sm:$0xf]
      %v225 = vld [vmem:[%s190 + $0x58] sm:$0xf]
      %v226 = vld [vmem:[%s190 + $0x5c] sm:$0xf]
      %v227 = vld [vmem:[%s190 + $0x60] sm:$0xf]
      %v228 = vld [vmem:[%s190 + $0x64] sm:$0xf]
      %v229 = vld [vmem:[%s190 + $0x68] sm:$0xf]
      %v230 = vld [vmem:[%s190 + $0x6c] sm:$0xf]
      %v231 = vld [vmem:[%s190 + $0x70] sm:$0xf]
      %v232 = vld [vmem:[%s190 + $0x74] sm:$0xf]
      %v233 = vld [vmem:[%s190 + $0x78] sm:$0xf]
      %v234 = vld [vmem:[%s190 + $0x7c] sm:$0xf]
      %v235 = vunpack.c.l.bf16 %v203
      %v236 = vunpack.c.l.bf16 %v204
      %v237 = vunpack.c.l.bf16 %v205
      %v238 = vunpack.c.l.bf16 %v206
      %v239 = vunpack.c.l.bf16 %v207
      %v240 = vunpack.c.l.bf16 %v208
      %v241 = vunpack.c.l.bf16 %v209
      %v242 = vunpack.c.l.bf16 %v210
      %v243 = vunpack.c.l.bf16 %v211
      %v244 = vunpack.c.l.bf16 %v212
      %v245 = vunpack.c.l.bf16 %v213
      %v246 = vunpack.c.l.bf16 %v214
      %v247 = vunpack.c.l.bf16 %v215
      %v248 = vunpack.c.l.bf16 %v216
      %v249 = vunpack.c.l.bf16 %v217
      %v250 = vunpack.c.l.bf16 %v218
      %v251 = vunpack.c.l.bf16 %v219
      %v252 = vunpack.c.l.bf16 %v220
      %v253 = vunpack.c.l.bf16 %v221
      %v254 = vunpack.c.l.bf16 %v222
      %v255 = vunpack.c.l.bf16 %v223
      %v256 = vunpack.c.l.bf16 %v224
      %v257 = vunpack.c.l.bf16 %v225
      %v258 = vunpack.c.l.bf16 %v226
      %v259 = vunpack.c.l.bf16 %v227
      %v260 = vunpack.c.l.bf16 %v228
      %v261 = vunpack.c.l.bf16 %v229
      %v262 = vunpack.c.l.bf16 %v230
      %v263 = vunpack.c.l.bf16 %v231
      %v264 = vunpack.c.l.bf16 %v232
      %v265 = vunpack.c.l.bf16 %v233
      %v266 = vunpack.c.l.bf16 %v234
      %v267 = vld [vmem:[%s1] sm:$0x1]
      %v269 = vlaneseq
      %v270 = vshrl.u32 %v269, 7
      %v271 = vsub.s32 0, %v270
      %v272 = vrot.slane %v267, %v271
      %v274 = vmul.f32 %v235, %v272
      %v275 = vmul.f32 %v236, %v272
      %v276 = vmul.f32 %v237, %v272
      %v277 = vmul.f32 %v238, %v272
      %v278 = vmul.f32 %v239, %v272
      %v279 = vmul.f32 %v240, %v272
      %v280 = vmul.f32 %v241, %v272
      %v281 = vmul.f32 %v242, %v272
      %v282 = vmul.f32 %v243, %v272
      %v283 = vmul.f32 %v244, %v272
      %v284 = vmul.f32 %v245, %v272
      %v285 = vmul.f32 %v246, %v272
      %v286 = vmul.f32 %v247, %v272
      %v287 = vmul.f32 %v248, %v272
      %v288 = vmul.f32 %v249, %v272
      %v289 = vmul.f32 %v250, %v272
      %v290 = vmul.f32 %v251, %v272
      %v291 = vmul.f32 %v252, %v272
      %v292 = vmul.f32 %v253, %v272
      %v293 = vmul.f32 %v254, %v272
      %v294 = vmul.f32 %v255, %v272
      %v295 = vmul.f32 %v256, %v272
      %v296 = vmul.f32 %v257, %v272
      %v297 = vmul.f32 %v258, %v272
      %v298 = vmul.f32 %v259, %v272
      %v299 = vmul.f32 %v260, %v272
      %v300 = vmul.f32 %v261, %v272
      %v301 = vmul.f32 %v262, %v272
      %v302 = vmul.f32 %v263, %v272
      %v303 = vmul.f32 %v264, %v272
      %v304 = vmul.f32 %v265, %v272
      %v305 = vmul.f32 %v266, %v272
      %v306 = vld [vmem:[%s2] sm:$0x1]
      %v308 = vlaneseq
      %v309 = vshrl.u32 %v308, 7
      %v310 = vsub.s32 0, %v309
      %v311 = vrot.slane %v306, %v310
      %v313 = vadd.f32 %v274, %v311
      %v314 = vadd.f32 %v275, %v311
      %v315 = vadd.f32 %v276, %v311
      %v316 = vadd.f32 %v277, %v311
      %v317 = vadd.f32 %v278, %v311
      %v318 = vadd.f32 %v279, %v311
      %v319 = vadd.f32 %v280, %v311
      %v320 = vadd.f32 %v281, %v311
      %v321 = vadd.f32 %v282, %v311
      %v322 = vadd.f32 %v283, %v311
      %v323 = vadd.f32 %v284, %v311
      %v324 = vadd.f32 %v285, %v311
      %v325 = vadd.f32 %v286, %v311
      %v326 = vadd.f32 %v287, %v311
      %v327 = vadd.f32 %v288, %v311
      %v328 = vadd.f32 %v289, %v311
      %v329 = vadd.f32 %v290, %v311
      %v330 = vadd.f32 %v291, %v311
      %v331 = vadd.f32 %v292, %v311
      %v332 = vadd.f32 %v293, %v311
      %v333 = vadd.f32 %v294, %v311
      %v334 = vadd.f32 %v295, %v311
      %v335 = vadd.f32 %v296, %v311
      %v336 = vadd.f32 %v297, %v311
      %v337 = vadd.f32 %v298, %v311
      %v338 = vadd.f32 %v299, %v311
      %v339 = vadd.f32 %v300, %v311
      %v340 = vadd.f32 %v301, %v311
      %v341 = vadd.f32 %v302, %v311
      %v342 = vadd.f32 %v303, %v311
      %v343 = vadd.f32 %v304, %v311
      %v344 = vadd.f32 %v305, %v311
      %v345 = vmax.f32 %v313, 0.0
      %v346 = vmax.f32 %v314, 0.0
      %v347 = vmax.f32 %v315, 0.0
      %v348 = vmax.f32 %v316, 0.0
      %v349 = vmax.f32 %v317, 0.0
      %v350 = vmax.f32 %v318, 0.0
      %v351 = vmax.f32 %v319, 0.0
      %v352 = vmax.f32 %v320, 0.0
      %v353 = vmax.f32 %v321, 0.0
      %v354 = vmax.f32 %v322, 0.0
      %v355 = vmax.f32 %v323, 0.0
      %v356 = vmax.f32 %v324, 0.0
      %v357 = vmax.f32 %v325, 0.0
      %v358 = vmax.f32 %v326, 0.0
      %v359 = vmax.f32 %v327, 0.0
      %v360 = vmax.f32 %v328, 0.0
      %v361 = vmax.f32 %v329, 0.0
      %v362 = vmax.f32 %v330, 0.0
      %v363 = vmax.f32 %v331, 0.0
      %v364 = vmax.f32 %v332, 0.0
      %v365 = vmax.f32 %v333, 0.0
      %v366 = vmax.f32 %v334, 0.0
      %v367 = vmax.f32 %v335, 0.0
      %v368 = vmax.f32 %v336, 0.0
      %v369 = vmax.f32 %v337, 0.0
      %v370 = vmax.f32 %v338, 0.0
      %v371 = vmax.f32 %v339, 0.0
      %v372 = vmax.f32 %v340, 0.0
      %v373 = vmax.f32 %v341, 0.0
      %v374 = vmax.f32 %v342, 0.0
      %v375 = vmax.f32 %v343, 0.0
      %v376 = vmax.f32 %v344, 0.0
      %377 = vxpose.xlu0.b32.start [1/16] %v345, 128
      %378 = vxpose.xlu0.b32.cont [2/16] %v346, 128
      %379 = vxpose.xlu0.b32.cont [3/16] %v347, 128
      %380 = vxpose.xlu0.b32.cont [4/16] %v348, 128
      %381 = vxpose.xlu0.b32.cont [5/16] %v349, 128
      %382 = vxpose.xlu0.b32.cont [6/16] %v350, 128
      %383 = vxpose.xlu0.b32.cont [7/16] %v351, 128
      %384 = vxpose.xlu0.b32.cont [8/16] %v352, 128
      %385 = vxpose.xlu0.b32.cont [9/16] %v353, 128
      %386 = vxpose.xlu0.b32.cont [10/16] %v354, 128
      %387 = vxpose.xlu0.b32.cont [11/16] %v355, 128
      %388 = vxpose.xlu0.b32.cont [12/16] %v356, 128
      %389 = vxpose.xlu0.b32.cont [13/16] %v357, 128
      %390 = vxpose.xlu0.b32.cont [14/16] %v358, 128
      %391 = vxpose.xlu0.b32.cont [15/16] %v359, 128
      %392 = vxpose.xlu0.b32.end [16/16] %v360, 128
      %v393 = vpop.trf.xlu0
      %v394 = vpop.trf.xlu0
      %v395 = vpop.trf.xlu0
      %v396 = vpop.trf.xlu0
      %v397 = vpop.trf.xlu0
      %v398 = vpop.trf.xlu0
      %v399 = vpop.trf.xlu0
      %v400 = vpop.trf.xlu0
      %v401 = vpop.trf.xlu0
      %v402 = vpop.trf.xlu0
      %v403 = vpop.trf.xlu0
      %v404 = vpop.trf.xlu0
      %v405 = vpop.trf.xlu0
      %v406 = vpop.trf.xlu0
      %v407 = vpop.trf.xlu0
      %v408 = vpop.trf.xlu0
      %409 = vxpose.xlu0.b32.start [1/16] %v361, 128
      %410 = vxpose.xlu0.b32.cont [2/16] %v362, 128
      %411 = vxpose.xlu0.b32.cont [3/16] %v363, 128
      %412 = vxpose.xlu0.b32.cont [4/16] %v364, 128
      %413 = vxpose.xlu0.b32.cont [5/16] %v365, 128
      %414 = vxpose.xlu0.b32.cont [6/16] %v366, 128
      %415 = vxpose.xlu0.b32.cont [7/16] %v367, 128
      %416 = vxpose.xlu0.b32.cont [8/16] %v368, 128
      %417 = vxpose.xlu0.b32.cont [9/16] %v369, 128
      %418 = vxpose.xlu0.b32.cont [10/16] %v370, 128
      %419 = vxpose.xlu0.b32.cont [11/16] %v371, 128
      %420 = vxpose.xlu0.b32.cont [12/16] %v372, 128
      %421 = vxpose.xlu0.b32.cont [13/16] %v373, 128
      %422 = vxpose.xlu0.b32.cont [14/16] %v374, 128
      %423 = vxpose.xlu0.b32.cont [15/16] %v375, 128
      %424 = vxpose.xlu0.b32.end [16/16] %v376, 128
      %v425 = vpop.trf.xlu0
      %v426 = vpop.trf.xlu0
      %v427 = vpop.trf.xlu0
      %v428 = vpop.trf.xlu0
      %v429 = vpop.trf.xlu0
      %v430 = vpop.trf.xlu0
      %v431 = vpop.trf.xlu0
      %v432 = vpop.trf.xlu0
      %v433 = vpop.trf.xlu0
      %v434 = vpop.trf.xlu0
      %v435 = vpop.trf.xlu0
      %v436 = vpop.trf.xlu0
      %v437 = vpop.trf.xlu0
      %v438 = vpop.trf.xlu0
      %v439 = vpop.trf.xlu0
      %v440 = vpop.trf.xlu0
      %441 = vst [vmem:[%s201] sm:$0xff] %v393
      %442 = vst [vmem:[%s201 + $0x8] sm:$0xff] %v425
      %s443 = smul.u32 2, %s19
      %p444 = scmp.lt.s32.totalorder %s18, 1
      %s445 = scalar_select %p444, %s18, 1
      %p446 = scmp.lt.s32.totalorder %s443, 1
      %s447 = scalar_select %p446, %s443, 1
      %s448 = smul.addr %s445, 2
      %s449 = sadd.s32 %s447, %s448
      %s450 = smul.addr %s449, 8
      %s451 = scalar_lea.vmem %s3, %s450
      // Predicated region
      $region33: #{basic_conv_forward.3} parent=31 // pred_check
        %p452 = pneg %p116
      $region34: #{basic_conv_forward.3} parent=31 // pred_check_branch
        %454 = sbr.rel (%p452) target = $region36
      $region35: #{basic_conv_forward.3} parent=31 // pred_region
        %s455 = smul.u32 2, %s19
      $region36: #{basic_conv_forward.3} parent=31 // pred_fallthru
        _
    $region32: #{basic_conv_forward.3} parent=5 // pred_fallthru
      _
    %p456 = scmp.le.s32.totalorder 2, %s9
    // Predicated region
    $region37: #{basic_conv_forward.3} parent=5 // pred_check
      %p457 = pneg %p456
    $region38: #{basic_conv_forward.3} parent=5 // pred_check_branch
      %459 = sbr.rel (%p457) target = $region40
    $region39: #{basic_conv_forward.3} parent=5 // pred_region
      %s460 = ssub.s32 %s9, 2
      // Predicated region
      $region41: #{basic_conv_forward.3} parent=39 // pred_check
        %p461 = pneg %p122
      $region42: #{basic_conv_forward.3} parent=39 // pred_check_branch
        %463 = sbr.rel (%p461) target = $region44
      $region43: #{basic_conv_forward.3} parent=39 // pred_region
        %s464 = smul.u32 2, %s21
        %p465 = scmp.lt.s32.totalorder %s20, 1
        %s466 = scalar_select %p465, %s20, 1
        %p467 = scmp.lt.s32.totalorder %s464, 1
        %s468 = scalar_select %p467, %s464, 1
        %s469 = smul.addr %s466, 2
        %s470 = sadd.s32 %s468, %s469
        %s471 = smul.addr %s470, 8
        %s472 = scalar_lea.vmem %s3, %s471
      $region44: #{basic_conv_forward.3} parent=39 // pred_fallthru
        _
    $region40: #{basic_conv_forward.3} parent=5 // pred_fallthru
      _
  $region6: #{basic_conv_forward.3} parent=0 // loop_footer
    %s13 = sadd.s32 1, %s9
  $region7: #{basic_conv_forward.3} parent=0 // loop_footer_branch
    %8 = sbr.rel target = $region3
  $region8: #{basic_conv_forward.3} parent=0 // loop_exit
    _

// kernel: basic_conv_forward.2
$region0: #{basic_conv_forward.2}
  #allocation0 [shape = 'u32[]', space=smem, size = 0x4, offset = 0x4, fixed_abs, tag = 'smem constant byte address 0x4 - core index']
  #allocation1 [shape = 'u32[144,128]{1,0:T(1,128)}', space=vmem, size = 0x12000, scoped, tag = 'internal scratch']
  %s0 = inlined_call_operand.vmem [shape: bf16[512,48], index: 0, kind: input, shape index: {}]
  %s1 = inlined_call_operand.vmem [shape: bf16[48,128], index: 1, kind: input, shape index: {}]
  %s2 = inlined_call_operand.vmem [shape: bf16[512,128], index: 2, kind: output, shape index: {0}]
  %s3 = inlined_call_operand.vmem [shape: f32[16,128], index: 3, kind: output, shape index: {1}]
  %s4 = inlined_call_operand.vmem [shape: f32[16,128], index: 4, kind: output, shape index: {2}]
  %5 = xla_tuple %s2, %s3, %s4
  %s6 = sld [smem:[#allocation0]]
  $region57: #{basic_conv_forward.2} parent=0
    _
  %s8 = ssub.s32 1, %s6
  %s9 = scalar_select 0, %s8, %s6
  loop: start=0, step=1, limit=4
  $region2: #{basic_conv_forward.2} parent=0 // loop_pre_header
    _
  $region3: #{basic_conv_forward.2} parent=0 // loop_header
    %s11 = sphi 0, %s15
    %p12 = scmp.ge.s32.totalorder %s11, 4
    %s18 = sphi 0, %s30
    %s19 = sphi 0, %s26
    %s20 = sphi 0, %s18
    %s21 = sphi 0, %s19
    %s22 = sphi 0, %s20
    %s23 = sphi 0, %s21
    %s33 = sphi 0, %s35
    %s36 = sphi 0, %s33
    %s37 = sphi 0, %s36
    %s53 = sphi 0, %s37
    %s59 = sphi 0, %s61
    %s62 = sphi 0, %s59
    %s63 = sphi 0, %s62
    %s79 = sphi 0, %s63
    %s87 = sphi 0, %s89
    %s90 = sphi 0, %s87
    %s91 = sphi 0, %s90
    %s107 = sphi 0, %s91
    %s115 = sphi 0, %s117
    %s118 = sphi 0, %s115
    %s119 = sphi 0, %s118
    %s135 = sphi 0, %s119
    %s143 = sphi 0, %s145
    %s146 = sphi 0, %s143
    %s147 = sphi 0, %s146
    %s163 = sphi 0, %s147
  $region4: #{basic_conv_forward.2} parent=0 // loop_header_branch
    %14 = sbr.rel (%p12) target = $region8
  $region5: #{basic_conv_forward.2} parent=0 // loop_body
    %s16 = ssub.s32 %s11, 1
    %s17 = ssub.s32 %s11, 2
    %s24 = sadd.s32 1, %s19
    %p25 = scmp.ge.s32.totalorder %s24, 1
    %s26 = scalar_select %p25, 0, %s24
    %s27 = sadd.s32 1, %s18
    %s28 = scalar_select %p25, %s27, %s18
    %p29 = scmp.ge.s32.totalorder %s28, 2
    %s30 = scalar_select %p29, 0, %s28
    %s31 = ssub.s32 %s18, %s30
    %p32 = scmp.eq.s32.totalorder %s31, 0
    %s34 = sadd.s32 %s33, 1
    %s35 = scalar_select %p32, %s33, %s34
    %p38 = pneg %p32
    %p39 = scmp.eq.s32.totalorder %s11, 1
    %p40 = por %p38, %p39
    %p41 = scmp.ne.s32.totalorder %s33, %s36
    %p42 = scmp.eq.s32.totalorder %s11, 0
    %p43 = por %p41, %p42
    %p44 = scmp.ne.s32.totalorder %s33, %s36
    %p45 = scmp.eq.s32.totalorder %s16, 1
    %p46 = por %p44, %p45
    %p47 = scmp.ne.s32.totalorder %s36, %s37
    %p48 = scmp.eq.s32.totalorder %s16, 0
    %p49 = por %p47, %p48
    %p50 = scmp.ne.s32.totalorder %s36, %s37
    %p51 = scmp.eq.s32.totalorder %s17, 1
    %p52 = por %p50, %p51
    %p54 = scmp.ne.s32.totalorder %s37, %s53
    %p55 = scmp.eq.s32.totalorder %s17, 0
    %p56 = por %p54, %p55
    %s57 = ssub.s32 %s19, %s26
    %p58 = scmp.eq.s32.totalorder %s57, 0
    %s60 = sadd.s32 %s59, 1
    %s61 = scalar_select %p58, %s59, %s60
    %p64 = pneg %p58
    %p65 = scmp.eq.s32.totalorder %s11, 1
    %p66 = por %p64, %p65
    %p67 = scmp.ne.s32.totalorder %s59, %s62
    %p68 = scmp.eq.s32.totalorder %s11, 0
    %p69 = por %p67, %p68
    %p70 = scmp.ne.s32.totalorder %s59, %s62
    %p71 = scmp.eq.s32.totalorder %s16, 1
    %p72 = por %p70, %p71
    %p73 = scmp.ne.s32.totalorder %s62, %s63
    %p74 = scmp.eq.s32.totalorder %s16, 0
    %p75 = por %p73, %p74
    %p76 = scmp.ne.s32.totalorder %s62, %s63
    %p77 = scmp.eq.s32.totalorder %s17, 1
    %p78 = por %p76, %p77
    %p80 = scmp.ne.s32.totalorder %s63, %s79
    %p81 = scmp.eq.s32.totalorder %s17, 0
    %p82 = por %p80, %p81
    %s83 = ssub.s32 %s18, %s30
    %s84 = ssub.s32 %s19, %s26
    %s85 = sor.u32 %s83, %s84
    %p86 = scmp.eq.s32.totalorder %s85, 0
    %s88 = sadd.s32 %s87, 1
    %s89 = scalar_select %p86, %s87, %s88
    %p92 = pneg %p86
    %p93 = scmp.eq.s32.totalorder %s11, 1
    %p94 = por %p92, %p93
    %p95 = scmp.ne.s32.totalorder %s87, %s90
    %p96 = scmp.eq.s32.totalorder %s11, 0
    %p97 = por %p95, %p96
    %p98 = scmp.ne.s32.totalorder %s87, %s90
    %p99 = scmp.eq.s32.totalorder %s16, 1
    %p100 = por %p98, %p99
    %p101 = scmp.ne.s32.totalorder %s90, %s91
    %p102 = scmp.eq.s32.totalorder %s16, 0
    %p103 = por %p101, %p102
    %p104 = scmp.ne.s32.totalorder %s90, %s91
    %p105 = scmp.eq.s32.totalorder %s17, 1
    %p106 = por %p104, %p105
    %p108 = scmp.ne.s32.totalorder %s91, %s107
    %p109 = scmp.eq.s32.totalorder %s17, 0
    %p110 = por %p108, %p109
    %s111 = ssub.s32 %s18, %s30
    %s112 = ssub.s32 %s19, %s26
    %s113 = sor.u32 %s111, %s112
    %p114 = scmp.eq.s32.totalorder %s113, 0
    %s116 = sadd.s32 %s115, 1
    %s117 = scalar_select %p114, %s115, %s116
    %p120 = pneg %p114
    %p121 = scmp.eq.s32.totalorder %s11, 1
    %p122 = por %p120, %p121
    %p123 = scmp.ne.s32.totalorder %s115, %s118
    %p124 = scmp.eq.s32.totalorder %s11, 0
    %p125 = por %p123, %p124
    %p126 = scmp.ne.s32.totalorder %s115, %s118
    %p127 = scmp.eq.s32.totalorder %s16, 1
    %p128 = por %p126, %p127
    %p129 = scmp.ne.s32.totalorder %s118, %s119
    %p130 = scmp.eq.s32.totalorder %s16, 0
    %p131 = por %p129, %p130
    %p132 = scmp.ne.s32.totalorder %s118, %s119
    %p133 = scmp.eq.s32.totalorder %s17, 1
    %p134 = por %p132, %p133
    %p136 = scmp.ne.s32.totalorder %s119, %s135
    %p137 = scmp.eq.s32.totalorder %s17, 0
    %p138 = por %p136, %p137
    %s139 = ssub.s32 %s18, %s30
    %s140 = ssub.s32 %s19, %s26
    %s141 = sor.u32 %s139, %s140
    %p142 = scmp.eq.s32.totalorder %s141, 0
    %s144 = sadd.s32 %s143, 1
    %s145 = scalar_select %p142, %s143, %s144
    %p148 = pneg %p142
    %p149 = scmp.eq.s32.totalorder %s11, 1
    %p150 = por %p148, %p149
    %p151 = scmp.ne.s32.totalorder %s143, %s146
    %p152 = scmp.eq.s32.totalorder %s11, 0
    %p153 = por %p151, %p152
    %p154 = scmp.ne.s32.totalorder %s143, %s146
    %p155 = scmp.eq.s32.totalorder %s16, 1
    %p156 = por %p154, %p155
    %p157 = scmp.ne.s32.totalorder %s146, %s147
    %p158 = scmp.eq.s32.totalorder %s16, 0
    %p159 = por %p157, %p158
    %p160 = scmp.ne.s32.totalorder %s146, %s147
    %p161 = scmp.eq.s32.totalorder %s17, 1
    %p162 = por %p160, %p161
    %p164 = scmp.ne.s32.totalorder %s147, %s163
    %p165 = scmp.eq.s32.totalorder %s17, 0
    %p166 = por %p164, %p165
    %p167 = scmp.le.s32.totalorder 1, %s11
    %p168 = scmp.lt.s32.totalorder %s11, 3
    %p169 = pnand %p167, %p168
    %p170 = pneg %p169
    // Predicated region
    $region9: #{basic_conv_forward.2} parent=5 // pred_check
      _
    $region10: #{basic_conv_forward.2} parent=5 // pred_check_branch
      %172 = sbr.rel (%p169) target = $region12
    $region11: #{basic_conv_forward.2} parent=5 // pred_region
      %s173 = ssub.s32 %s11, 1
      // Predicated region
      $region13: #{basic_conv_forward.2} parent=11 // pred_check
        %p174 = pneg %p75
      $region14: #{basic_conv_forward.2} parent=11 // pred_check_branch
        %176 = sbr.rel (%p174) target = $region16
      $region15: #{basic_conv_forward.2} parent=11 // pred_region
        %p177 = scmp.lt.s32.totalorder %s21, 0
        %s178 = scalar_select %p177, %s21, 0
        %s179 = smul.addr %s178, 4
        %s180 = scalar_lea.vmem %s1, %s179
      $region16: #{basic_conv_forward.2} parent=11 // pred_fallthru
        _
    $region12: #{basic_conv_forward.2} parent=5 // pred_fallthru
      _
    %p181 = scmp.lt.s32.totalorder %s11, 2
    // Predicated region
    $region17: #{basic_conv_forward.2} parent=5 // pred_check
      %p182 = pneg %p181
    $region18: #{basic_conv_forward.2} parent=5 // pred_check_branch
      %184 = sbr.rel (%p182) target = $region20
    $region19: #{basic_conv_forward.2} parent=5 // pred_region
      // Predicated region
      $region21: #{basic_conv_forward.2} parent=19 // pred_check
        %p185 = pneg %p43
      $region22: #{basic_conv_forward.2} parent=19 // pred_check_branch
        %187 = sbr.rel (%p185) target = $region24
      $region23: #{basic_conv_forward.2} parent=19 // pred_region
        %s188 = smul.u32 32, %s18
        %p189 = scmp.lt.s32.totalorder %s188, 63
        %s190 = scalar_select %p189, %s188, 63
        %s191 = smul.addr %s190, 4
        %s192 = scalar_lea.vmem %s0, %s191
        %s193 = smul.u32 32, %s18
      $region24: #{basic_conv_forward.2} parent=19 // pred_fallthru
        _
    $region20: #{basic_conv_forward.2} parent=5 // pred_fallthru
      _
    %p194 = scmp.le.s32.totalorder 1, %s11
    %p195 = scmp.lt.s32.totalorder %s11, 3
    %p196 = pnand %p194, %p195
    %p197 = pneg %p196
    // Predicated region
    $region25: #{basic_conv_forward.2} parent=5 // pred_check
      _
    $region26: #{basic_conv_forward.2} parent=5 // pred_check_branch
      %199 = sbr.rel (%p196) target = $region28
    $region27: #{basic_conv_forward.2} parent=5 // pred_region
      %s200 = ssub.s32 %s11, 1
      %s201 = smul.u32 32, %s20
      %p202 = scmp.lt.s32.totalorder %s201, 63
      %s203 = scalar_select %p202, %s201, 63
      %s204 = smul.addr %s203, 4
      %s205 = scalar_lea.vmem %s0, %s204
      %p206 = pneg %p49
      %p207 = pneg %p46
      %p208 = scmp.lt.s32.totalorder %s21, 0
      %s209 = scalar_select %p208, %s21, 0
      %s210 = smul.addr %s209, 4
      %s211 = scalar_lea.vmem %s1, %s210
      %p212 = pneg %p75
      %p213 = pneg %p72
      %p214 = pneg %p103
      %p215 = pneg %p100
      %s216 = smul.u32 32, %s20
      %p217 = scmp.lt.s32.totalorder %s216, 63
      %s218 = scalar_select %p217, %s216, 63
      %p219 = scmp.lt.s32.totalorder %s21, 0
      %s220 = scalar_select %p219, %s21, 0
      %s221 = sadd.s32 %s220, %s218
      %s222 = smul.addr %s221, 4
      %s223 = scalar_lea.vmem %s2, %s222
      %p224 = pneg %p131
      %p225 = pneg %p128
      %p226 = scmp.lt.s32.totalorder %s20, 1
      %s227 = scalar_select %p226, %s20, 1
      %p228 = scmp.lt.s32.totalorder %s21, 0
      %s229 = scalar_select %p228, %s21, 0
      %s230 = sadd.s32 %s229, %s227
      %s231 = smul.addr %s230, 8
      %s232 = scalar_lea.vmem %s3, %s231
      %p233 = pneg %p159
      %p234 = pneg %p156
      %p235 = scmp.lt.s32.totalorder %s20, 1
      %s236 = scalar_select %p235, %s20, 1
      %p237 = scmp.lt.s32.totalorder %s21, 0
      %s238 = scalar_select %p237, %s21, 0
      %s239 = sadd.s32 %s238, %s236
      %s240 = smul.addr %s239, 8
      %s241 = scalar_lea.vmem %s4, %s240
      %s242 = smul.u32 32, %s20
      %p243 = scmp.lt.s32.totalorder %s242, 63
      %s244 = scalar_select %p243, %s242, 63
      %s245 = smul.addr %s244, 4
      %s246 = scalar_lea.vmem %s0, %s245
      %s247 = smul.u32 32, %s20
      %p248 = scmp.lt.s32.totalorder %s21, 0
      %s249 = scalar_select %p248, %s21, 0
      %s250 = smul.addr %s249, 4
      %s251 = scalar_lea.vmem %s1, %s250
      %s252 = smul.u32 32, %s20
      %p253 = scmp.lt.s32.totalorder %s252, 63
      %s254 = scalar_select %p253, %s252, 63
      %p255 = scmp.lt.s32.totalorder %s21, 0
      %s256 = scalar_select %p255, %s21, 0
      %s257 = sadd.s32 %s256, %s254
      %s258 = smul.addr %s257, 4
      %s259 = scalar_lea.vmem %s2, %s258
      %s260 = smul.u32 32, %s20
      %p261 = scmp.lt.s32.totalorder %s20, 1
      %s262 = scalar_select %p261, %s20, 1
      %p263 = scmp.lt.s32.totalorder %s21, 0
      %s264 = scalar_select %p263, %s21, 0
      %s265 = sadd.s32 %s264, %s262
      %s266 = smul.addr %s265, 8
      %s267 = scalar_lea.vmem %s3, %s266
      %p268 = scmp.lt.s32.totalorder %s20, 1
      %s269 = scalar_select %p268, %s20, 1
      %p270 = scmp.lt.s32.totalorder %s21, 0
      %s271 = scalar_select %p270, %s21, 0
      %s272 = sadd.s32 %s271, %s269
      %s273 = smul.addr %s272, 8
      %s274 = scalar_lea.vmem %s4, %s273
      %v276 = vld [vmem:[%s246] sm:$0xf]
      %v277 = vld [vmem:[%s246 + $0x4] sm:$0xf]
      %v278 = vld [vmem:[%s246 + $0x8] sm:$0xf]
      %v279 = vld [vmem:[%s246 + $0xc] sm:$0xf]
      %v280 = vld [vmem:[%s246 + $0x10] sm:$0xf]
      %v281 = vld [vmem:[%s246 + $0x14] sm:$0xf]
      %v282 = vld [vmem:[%s246 + $0x18] sm:$0xf]
      %v283 = vld [vmem:[%s246 + $0x1c] sm:$0xf]
      %v284 = vld [vmem:[%s246 + $0x20] sm:$0xf]
      %v285 = vld [vmem:[%s246 + $0x24] sm:$0xf]
      %v286 = vld [vmem:[%s246 + $0x28] sm:$0xf]
      %v287 = vld [vmem:[%s246 + $0x2c] sm:$0xf]
      %v288 = vld [vmem:[%s246 + $0x30] sm:$0xf]
      %v289 = vld [vmem:[%s246 + $0x34] sm:$0xf]
      %v290 = vld [vmem:[%s246 + $0x38] sm:$0xf]
      %v291 = vld [vmem:[%s246 + $0x3c] sm:$0xf]
      %v292 = vld [vmem:[%s246 + $0x40] sm:$0xf]
      %v293 = vld [vmem:[%s246 + $0x44] sm:$0xf]
      %v294 = vld [vmem:[%s246 + $0x48] sm:$0xf]
      %v295 = vld [vmem:[%s246 + $0x4c] sm:$0xf]
      %v296 = vld [vmem:[%s246 + $0x50] sm:$0xf]
      %v297 = vld [vmem:[%s246 + $0x54] sm:$0xf]
      %v298 = vld [vmem:[%s246 + $0x58] sm:$0xf]
      %v299 = vld [vmem:[%s246 + $0x5c] sm:$0xf]
      %v300 = vld [vmem:[%s246 + $0x60] sm:$0xf]
      %v301 = vld [vmem:[%s246 + $0x64] sm:$0xf]
      %v302 = vld [vmem:[%s246 + $0x68] sm:$0xf]
      %v303 = vld [vmem:[%s246 + $0x6c] sm:$0xf]
      %v304 = vld [vmem:[%s246 + $0x70] sm:$0xf]
      %v305 = vld [vmem:[%s246 + $0x74] sm:$0xf]
      %v306 = vld [vmem:[%s246 + $0x78] sm:$0xf]
      %v307 = vld [vmem:[%s246 + $0x7c] sm:$0xf]
      %v308 = vld [vmem:[%s251] sm:$0xf]
      %v309 = vld [vmem:[%s251 + $0x4] sm:$0xf]
      %v310 = vld [vmem:[%s251 + $0x8] sm:$0xf]
      %v311 = vld [vmem:[%s251 + $0xc] sm:$0xf]
      %v312 = vld [vmem:[%s251 + $0x10] sm:$0xf]
      %v313 = vld [vmem:[%s251 + $0x14] sm:$0xf]
      %v346 = vunpack.c.l.b16 %v276
      %v347 = vunpack.c.l.b16 %v277
      %v348 = vunpack.c.l.b16 %v278
      %v349 = vunpack.c.l.b16 %v279
      %v350 = vunpack.c.l.b16 %v280
      %v351 = vunpack.c.l.b16 %v281
      %v352 = vunpack.c.l.b16 %v282
      %v353 = vunpack.c.l.b16 %v283
      %v354 = vunpack.c.l.b16 %v284
      %v355 = vunpack.c.l.b16 %v285
      %v356 = vunpack.c.l.b16 %v286
      %v357 = vunpack.c.l.b16 %v287
      %v358 = vunpack.c.l.b16 %v288
      %v359 = vunpack.c.l.b16 %v289
      %v360 = vunpack.c.l.b16 %v290
      %v361 = vunpack.c.l.b16 %v291
      %v362 = vunpack.c.l.b16 %v292
      %v363 = vunpack.c.l.b16 %v293
      %v364 = vunpack.c.l.b16 %v294
      %v365 = vunpack.c.l.b16 %v295
      %v366 = vunpack.c.l.b16 %v296
      %v367 = vunpack.c.l.b16 %v297
      %v368 = vunpack.c.l.b16 %v298
      %v369 = vunpack.c.l.b16 %v299
      %v370 = vunpack.c.l.b16 %v300
      %v371 = vunpack.c.l.b16 %v301
      %v372 = vunpack.c.l.b16 %v302
      %v373 = vunpack.c.l.b16 %v303
      %v374 = vunpack.c.l.b16 %v304
      %v375 = vunpack.c.l.b16 %v305
      %v376 = vunpack.c.l.b16 %v306
      %v377 = vunpack.c.l.b16 %v307
      %v378 = vpack.c.b16 %v347, %v346
      %v379 = vpack.c.b16 %v349, %v348
      %v380 = vpack.c.b16 %v351, %v350
      %v381 = vpack.c.b16 %v353, %v352
      %v382 = vpack.c.b16 %v355, %v354
      %v383 = vpack.c.b16 %v357, %v356
      %v384 = vpack.c.b16 %v359, %v358
      %v385 = vpack.c.b16 %v361, %v360
      %v386 = vpack.c.b16 %v363, %v362
      %v387 = vpack.c.b16 %v365, %v364
      %v388 = vpack.c.b16 %v367, %v366
      %v389 = vpack.c.b16 %v369, %v368
      %v390 = vpack.c.b16 %v371, %v370
      %v391 = vpack.c.b16 %v373, %v372
      %v392 = vpack.c.b16 %v375, %v374
      %v393 = vpack.c.b16 %v377, %v376
      %v400 = vunpack.c.l.b16 %v308
      %v401 = vunpack.c.l.b16 %v309
      %v402 = vunpack.c.l.b16 %v310
      %v403 = vunpack.c.l.b16 %v311
      %v404 = vunpack.c.l.b16 %v312
      %v405 = vunpack.c.l.b16 %v313
      %v406 = vpack.c.b16 %v401, %v400
      %v407 = vpack.c.b16 %v403, %v402
      %v408 = vpack.c.b16 %v405, %v404
      %vm412 = vcmask 392192
      %v414 = vsel %vm412, %v378, 0
      %v417 = vsel %vm412, %v379, 0
      %v420 = vsel %vm412, %v380, 0
      %v423 = vsel %vm412, %v381, 0
      %v426 = vsel %vm412, %v382, 0
      %v429 = vsel %vm412, %v383, 0
      %v432 = vsel %vm412, %v384, 0
      %v435 = vsel %vm412, %v385, 0
      %v438 = vsel %vm412, %v386, 0
      %v441 = vsel %vm412, %v387, 0
      %v444 = vsel %vm412, %v388, 0
      %v447 = vsel %vm412, %v389, 0
      %v450 = vsel %vm412, %v390, 0
      %v453 = vsel %vm412, %v391, 0
      %v456 = vsel %vm412, %v392, 0
      %v459 = vsel %vm412, %v393, 0
      %461 = vmatprep.subr.bf16.mxu0 0
      %462 = vmatpush1.bf16.msra.mxu0 0
      %463 = vmatprep.subr.bf16.mxu0 0
      %464 = vmatpush1.bf16.msra.mxu0 0
      %465 = vmatprep.subr.bf16.mxu0 0
      %466 = vmatpush1.bf16.msra.mxu0 0
      %467 = vmatprep.subr.bf16.mxu0 0
      %468 = vmatpush1.bf16.msra.mxu0 0
      %469 = vmatprep.subr.bf16.mxu0 0
      %470 = vmatpush1.bf16.msra.mxu0 0
      %471 = vmatprep.subr.bf16.mxu0 0
      %472 = vmatpush1.bf16.msra.mxu0 %v408
      %473 = vmatprep.subr.bf16.mxu0 0
      %474 = vmatpush1.bf16.msra.mxu0 %v407
      %475 = vmatprep.subr.bf16.mxu0 0
      %476 = vmatpush1.bf16.msra.mxu0 %v406
      %477 = vmatprep.subr.bf16.mxu0 0
      %478 = vmatpush2.bf16.msra.mxu0 0
      %479 = vmatprep.subr.bf16.mxu0 0
      %480 = vmatpush2.bf16.msra.mxu0 0
      %481 = vmatprep.subr.bf16.mxu0 0
      %482 = vmatpush2.bf16.msra.mxu0 0
      %483 = vmatprep.subr.bf16.mxu0 0
      %484 = vmatpush2.bf16.msra.mxu0 0
      %485 = vmatprep.subr.bf16.mxu0 0
      %486 = vmatpush2.bf16.msra.mxu0 0
      %487 = vmatprep.subr.bf16.mxu0 0
      %488 = vmatpush2.bf16.msra.mxu0 0
      %489 = vmatprep.subr.bf16.mxu0 0
      %490 = vmatpush2.bf16.msra.mxu0 0
      %491 = vmatprep.subr.bf16.mxu0 0
      %492 = vmatpush2.bf16.msra.mxu0 0
      %493 = vmatprep.mubr.bf16.mxu0 0
      %494 = vmatmul.mubr.bf16.gmra.mxu0 %v414
      %v495 = vpop.f32.mrf.mxu0
      %v496 = vadd.f32 0.0, %v495
      %v497 = vpop.f32.mrf.mxu0
      %v498 = vpop.f32.mrf.mxu0
      %v499 = vadd.f32 0.0, %v498
      %v500 = vpop.f32.mrf.mxu0
      %501 = vmatprep.mubr.bf16.mxu0 0
      %502 = vmatmul.mubr.bf16.gmra.mxu0 %v417
      %v503 = vpop.f32.mrf.mxu0
      %v504 = vadd.f32 0.0, %v503
      %v505 = vpop.f32.mrf.mxu0
      %v506 = vpop.f32.mrf.mxu0
      %v507 = vadd.f32 0.0, %v506
      %v508 = vpop.f32.mrf.mxu0
      %509 = vmatprep.mubr.bf16.mxu0 0
      %510 = vmatmul.mubr.bf16.gmra.mxu0 %v420
      %v511 = vpop.f32.mrf.mxu0
      %v512 = vadd.f32 0.0, %v511
      %v513 = vpop.f32.mrf.mxu0
      %v514 = vpop.f32.mrf.mxu0
      %v515 = vadd.f32 0.0, %v514
      %v516 = vpop.f32.mrf.mxu0
      %517 = vmatprep.mubr.bf16.mxu0 0
      %518 = vmatmul.mubr.bf16.gmra.mxu0 %v423
      %v519 = vpop.f32.mrf.mxu0
      %v520 = vadd.f32 0.0, %v519
      %v521 = vpop.f32.mrf.mxu0
      %v522 = vpop.f32.mrf.mxu0
      %v523 = vadd.f32 0.0, %v522
      %v524 = vpop.f32.mrf.mxu0
      %525 = vmatprep.mubr.bf16.mxu0 0
      %526 = vmatmul.mubr.bf16.gmra.mxu0 %v426
      %v527 = vpop.f32.mrf.mxu0
      %v528 = vadd.f32 0.0, %v527
      %v529 = vpop.f32.mrf.mxu0
      %v530 = vpop.f32.mrf.mxu0
      %v531 = vadd.f32 0.0, %v530
      %v532 = vpop.f32.mrf.mxu0
      %533 = vmatprep.mubr.bf16.mxu0 0
      %534 = vmatmul.mubr.bf16.gmra.mxu0 %v429
      %v535 = vpop.f32.mrf.mxu0
      %v536 = vadd.f32 0.0, %v535
      %v537 = vpop.f32.mrf.mxu0
      %v538 = vpop.f32.mrf.mxu0
      %v539 = vadd.f32 0.0, %v538
      %v540 = vpop.f32.mrf.mxu0
      %541 = vmatprep.mubr.bf16.mxu0 0
      %542 = vmatmul.mubr.bf16.gmra.mxu0 %v432
      %v543 = vpop.f32.mrf.mxu0
      %v544 = vadd.f32 0.0, %v543
      %v545 = vpop.f32.mrf.mxu0
      %v546 = vpop.f32.mrf.mxu0
      %v547 = vadd.f32 0.0, %v546
      %v548 = vpop.f32.mrf.mxu0
      %549 = vmatprep.mubr.bf16.mxu0 0
      %550 = vmatmul.mubr.bf16.gmra.mxu0 %v435
      %v551 = vpop.f32.mrf.mxu0
      %v552 = vadd.f32 0.0, %v551
      %v553 = vpop.f32.mrf.mxu0
      %v554 = vpop.f32.mrf.mxu0
      %v555 = vadd.f32 0.0, %v554
      %v556 = vpop.f32.mrf.mxu0
      %557 = vmatprep.mubr.bf16.mxu0 0
      %558 = vmatmul.mubr.bf16.gmra.mxu0 %v438
      %v559 = vpop.f32.mrf.mxu0
      %v560 = vadd.f32 0.0, %v559
      %v561 = vpop.f32.mrf.mxu0
      %v562 = vpop.f32.mrf.mxu0
      %v563 = vadd.f32 0.0, %v562
      %v564 = vpop.f32.mrf.mxu0
      %565 = vmatprep.mubr.bf16.mxu0 0
      %566 = vmatmul.mubr.bf16.gmra.mxu0 %v441
      %v567 = vpop.f32.mrf.mxu0
      %v568 = vadd.f32 0.0, %v567
      %v569 = vpop.f32.mrf.mxu0
      %v570 = vpop.f32.mrf.mxu0
      %v571 = vadd.f32 0.0, %v570
      %v572 = vpop.f32.mrf.mxu0
      %573 = vmatprep.mubr.bf16.mxu0 0
      %574 = vmatmul.mubr.bf16.gmra.mxu0 %v444
      %v575 = vpop.f32.mrf.mxu0
      %v576 = vadd.f32 0.0, %v575
      %v577 = vpop.f32.mrf.mxu0
      %v578 = vpop.f32.mrf.mxu0
      %v579 = vadd.f32 0.0, %v578
      %v580 = vpop.f32.mrf.mxu0
      %581 = vmatprep.mubr.bf16.mxu0 0
      %582 = vmatmul.mubr.bf16.gmra.mxu0 %v447
      %v583 = vpop.f32.mrf.mxu0
      %v584 = vadd.f32 0.0, %v583
      %v585 = vpop.f32.mrf.mxu0
      %v586 = vpop.f32.mrf.mxu0
      %v587 = vadd.f32 0.0, %v586
      %v588 = vpop.f32.mrf.mxu0
      %589 = vmatprep.mubr.bf16.mxu0 0
      %590 = vmatmul.mubr.bf16.gmra.mxu0 %v450
      %v591 = vpop.f32.mrf.mxu0
      %v592 = vadd.f32 0.0, %v591
      %v593 = vpop.f32.mrf.mxu0
      %v594 = vpop.f32.mrf.mxu0
      %v595 = vadd.f32 0.0, %v594
      %v596 = vpop.f32.mrf.mxu0
      %597 = vmatprep.mubr.bf16.mxu0 0
      %598 = vmatmul.mubr.bf16.gmra.mxu0 %v453
      %v599 = vpop.f32.mrf.mxu0
      %v600 = vadd.f32 0.0, %v599
      %v601 = vpop.f32.mrf.mxu0
      %v602 = vpop.f32.mrf.mxu0
      %v603 = vadd.f32 0.0, %v602
      %v604 = vpop.f32.mrf.mxu0
      %605 = vmatprep.mubr.bf16.mxu0 0
      %606 = vmatmul.mubr.bf16.gmra.mxu0 %v456
      %v607 = vpop.f32.mrf.mxu0
      %v608 = vadd.f32 0.0, %v607
      %v609 = vpop.f32.mrf.mxu0
      %v610 = vpop.f32.mrf.mxu0
      %v611 = vadd.f32 0.0, %v610
      %v612 = vpop.f32.mrf.mxu0
      %613 = vmatprep.mubr.bf16.mxu0 0
      %614 = vmatmul.mubr.bf16.gmra.mxu0 %v459
      %v615 = vpop.f32.mrf.mxu0
      %v616 = vadd.f32 0.0, %v615
      %v617 = vpop.f32.mrf.mxu0
      %v618 = vpop.f32.mrf.mxu0
      %v619 = vadd.f32 0.0, %v618
      %v620 = vpop.f32.mrf.mxu0
      %621 = vdwg.mxu0
      %v622 = vpack.c.bf16 %v499, %v496
      %v623 = vpack.c.bf16 %v507, %v504
      %v624 = vpack.c.bf16 %v515, %v512
      %v625 = vpack.c.bf16 %v523, %v520
      %v626 = vpack.c.bf16 %v531, %v528
      %v627 = vpack.c.bf16 %v539, %v536
      %v628 = vpack.c.bf16 %v547, %v544
      %v629 = vpack.c.bf16 %v555, %v552
      %v630 = vpack.c.bf16 %v563, %v560
      %v631 = vpack.c.bf16 %v571, %v568
      %v632 = vpack.c.bf16 %v579, %v576
      %v633 = vpack.c.bf16 %v587, %v584
      %v634 = vpack.c.bf16 %v595, %v592
      %v635 = vpack.c.bf16 %v603, %v600
      %v636 = vpack.c.bf16 %v611, %v608
      %v637 = vpack.c.bf16 %v619, %v616
      %v654 = vunpack.c.l.b16 %v622
      %v655 = vunpack.c.h.b16 %v622
      %v656 = vunpack.c.l.b16 %v623
      %v657 = vunpack.c.h.b16 %v623
      %v658 = vunpack.c.l.b16 %v624
      %v659 = vunpack.c.h.b16 %v624
      %v660 = vunpack.c.l.b16 %v625
      %v661 = vunpack.c.h.b16 %v625
      %v662 = vunpack.c.l.b16 %v626
      %v663 = vunpack.c.h.b16 %v626
      %v664 = vunpack.c.l.b16 %v627
      %v665 = vunpack.c.h.b16 %v627
      %v666 = vunpack.c.l.b16 %v628
      %v667 = vunpack.c.h.b16 %v628
      %v668 = vunpack.c.l.b16 %v629
      %v669 = vunpack.c.h.b16 %v629
      %v670 = vunpack.c.l.b16 %v630
      %v671 = vunpack.c.h.b16 %v630
      %v672 = vunpack.c.l.b16 %v631
      %v673 = vunpack.c.h.b16 %v631
      %v674 = vunpack.c.l.b16 %v632
      %v675 = vunpack.c.h.b16 %v632
      %v676 = vunpack.c.l.b16 %v633
      %v677 = vunpack.c.h.b16 %v633
      %v678 = vunpack.c.l.b16 %v634
      %v679 = vunpack.c.h.b16 %v634
      %v680 = vunpack.c.l.b16 %v635
      %v681 = vunpack.c.h.b16 %v635
      %v682 = vunpack.c.l.b16 %v636
      %v683 = vunpack.c.h.b16 %v636
      %v684 = vunpack.c.l.b16 %v637
      %v685 = vunpack.c.h.b16 %v637
      %v686 = vpack.c.b16 %v654, %v654
      %v687 = vpack.c.b16 %v655, %v655
      %v688 = vpack.c.b16 %v656, %v656
      %v689 = vpack.c.b16 %v657, %v657
      %v690 = vpack.c.b16 %v658, %v658
      %v691 = vpack.c.b16 %v659, %v659
      %v692 = vpack.c.b16 %v660, %v660
      %v693 = vpack.c.b16 %v661, %v661
      %v694 = vpack.c.b16 %v662, %v662
      %v695 = vpack.c.b16 %v663, %v663
      %v696 = vpack.c.b16 %v664, %v664
      %v697 = vpack.c.b16 %v665, %v665
      %v698 = vpack.c.b16 %v666, %v666
      %v699 = vpack.c.b16 %v667, %v667
      %v700 = vpack.c.b16 %v668, %v668
      %v701 = vpack.c.b16 %v669, %v669
      %v702 = vpack.c.b16 %v670, %v670
      %v703 = vpack.c.b16 %v671, %v671
      %v704 = vpack.c.b16 %v672, %v672
      %v705 = vpack.c.b16 %v673, %v673
      %v706 = vpack.c.b16 %v674, %v674
      %v707 = vpack.c.b16 %v675, %v675
      %v708 = vpack.c.b16 %v676, %v676
      %v709 = vpack.c.b16 %v677, %v677
      %v710 = vpack.c.b16 %v678, %v678
      %v711 = vpack.c.b16 %v679, %v679
      %v712 = vpack.c.b16 %v680, %v680
      %v713 = vpack.c.b16 %v681, %v681
      %v714 = vpack.c.b16 %v682, %v682
      %v715 = vpack.c.b16 %v683, %v683
      %v716 = vpack.c.b16 %v684, %v684
      %v717 = vpack.c.b16 %v685, %v685
      %750 = vst [vmem:[%s259] sm:$0xf] %v686
      %751 = vst [vmem:[%s259 + $0x4] sm:$0xf] %v687
      %752 = vst [vmem:[%s259 + $0x8] sm:$0xf] %v688
      %753 = vst [vmem:[%s259 + $0xc] sm:$0xf] %v689
      %754 = vst [vmem:[%s259 + $0x10] sm:$0xf] %v690
      %755 = vst [vmem:[%s259 + $0x14] sm:$0xf] %v691
      %756 = vst [vmem:[%s259 + $0x18] sm:$0xf] %v692
      %757 = vst [vmem:[%s259 + $0x1c] sm:$0xf] %v693
      %758 = vst [vmem:[%s259 + $0x20] sm:$0xf] %v694
      %759 = vst [vmem:[%s259 + $0x24] sm:$0xf] %v695
      %760 = vst [vmem:[%s259 + $0x28] sm:$0xf] %v696
      %761 = vst [vmem:[%s259 + $0x2c] sm:$0xf] %v697
      %762 = vst [vmem:[%s259 + $0x30] sm:$0xf] %v698
      %763 = vst [vmem:[%s259 + $0x34] sm:$0xf] %v699
      %764 = vst [vmem:[%s259 + $0x38] sm:$0xf] %v700
      %765 = vst [vmem:[%s259 + $0x3c] sm:$0xf] %v701
      %766 = vst [vmem:[%s259 + $0x40] sm:$0xf] %v702
      %767 = vst [vmem:[%s259 + $0x44] sm:$0xf] %v703
      %768 = vst [vmem:[%s259 + $0x48] sm:$0xf] %v704
      %769 = vst [vmem:[%s259 + $0x4c] sm:$0xf] %v705
      %770 = vst [vmem:[%s259 + $0x50] sm:$0xf] %v706
      %771 = vst [vmem:[%s259 + $0x54] sm:$0xf] %v707
      %772 = vst [vmem:[%s259 + $0x58] sm:$0xf] %v708
      %773 = vst [vmem:[%s259 + $0x5c] sm:$0xf] %v709
      %774 = vst [vmem:[%s259 + $0x60] sm:$0xf] %v710
      %775 = vst [vmem:[%s259 + $0x64] sm:$0xf] %v711
      %776 = vst [vmem:[%s259 + $0x68] sm:$0xf] %v712
      %777 = vst [vmem:[%s259 + $0x6c] sm:$0xf] %v713
      %778 = vst [vmem:[%s259 + $0x70] sm:$0xf] %v714
      %779 = vst [vmem:[%s259 + $0x74] sm:$0xf] %v715
      %780 = vst [vmem:[%s259 + $0x78] sm:$0xf] %v716
      %781 = vst [vmem:[%s259 + $0x7c] sm:$0xf] %v717
      %v782 = vadd.f32 %v496, %v499
      %v783 = vadd.f32 %v782, %v504
      %v784 = vadd.f32 %v783, %v507
      %v785 = vadd.f32 %v784, %v512
      %v786 = vadd.f32 %v785, %v515
      %v787 = vadd.f32 %v786, %v520
      %v788 = vadd.f32 %v787, %v523
      %v789 = vadd.f32 %v788, %v528
      %v790 = vadd.f32 %v789, %v531
      %v791 = vadd.f32 %v790, %v536
      %v792 = vadd.f32 %v791, %v539
      %v793 = vadd.f32 %v792, %v544
      %v794 = vadd.f32 %v793, %v547
      %v795 = vadd.f32 %v794, %v552
      %v796 = vadd.f32 %v795, %v555
      %v797 = vadd.f32 %v796, %v560
      %v798 = vadd.f32 %v797, %v563
      %v799 = vadd.f32 %v798, %v568
      %v800 = vadd.f32 %v799, %v571
      %v801 = vadd.f32 %v800, %v576
      %v802 = vadd.f32 %v801, %v579
      %v803 = vadd.f32 %v802, %v584
      %v804 = vadd.f32 %v803, %v587
      %v805 = vadd.f32 %v804, %v592
      %v806 = vadd.f32 %v805, %v595
      %v807 = vadd.f32 %v806, %v600
      %v808 = vadd.f32 %v807, %v603
      %v809 = vadd.f32 %v808, %v608
      %v810 = vadd.f32 %v809, %v611
      %v811 = vadd.f32 %v810, %v616
      %v812 = vadd.f32 %v811, %v619
      %v813 = vrot.slane %v812, 4
      %v814 = vadd.f32 %v812, %v813
      %v815 = vrot.slane %v814, 2
      %v816 = vadd.f32 %v814, %v815
      %v817 = vrot.slane %v816, 1
      %v818 = vadd.f32 %v816, %v817
      %819 = vst [vmem:[%s267] sm:$0xff] %v818
      %v820 = vmul.f32 %v496, %v496
      %v821 = vmul.f32 %v499, %v499
      %v822 = vmul.f32 %v504, %v504
      %v823 = vmul.f32 %v507, %v507
      %v824 = vmul.f32 %v512, %v512
      %v825 = vmul.f32 %v515, %v515
      %v826 = vmul.f32 %v520, %v520
      %v827 = vmul.f32 %v523, %v523
      %v828 = vmul.f32 %v528, %v528
      %v829 = vmul.f32 %v531, %v531
      %v830 = vmul.f32 %v536, %v536
      %v831 = vmul.f32 %v539, %v539
      %v832 = vmul.f32 %v544, %v544
      %v833 = vmul.f32 %v547, %v547
      %v834 = vmul.f32 %v552, %v552
      %v835 = vmul.f32 %v555, %v555
      %v836 = vmul.f32 %v560, %v560
      %v837 = vmul.f32 %v563, %v563
      %v838 = vmul.f32 %v568, %v568
      %v839 = vmul.f32 %v571, %v571
      %v840 = vmul.f32 %v576, %v576
      %v841 = vmul.f32 %v579, %v579
      %v842 = vmul.f32 %v584, %v584
      %v843 = vmul.f32 %v587, %v587
      %v844 = vmul.f32 %v592, %v592
      %v845 = vmul.f32 %v595, %v595
      %v846 = vmul.f32 %v600, %v600
      %v847 = vmul.f32 %v603, %v603
      %v848 = vmul.f32 %v608, %v608
      %v849 = vmul.f32 %v611, %v611
      %v850 = vmul.f32 %v616, %v616
      %v851 = vmul.f32 %v619, %v619
      %v852 = vadd.f32 %v820, %v821
      %v853 = vadd.f32 %v852, %v822
      %v854 = vadd.f32 %v853, %v823
      %v855 = vadd.f32 %v854, %v824
      %v856 = vadd.f32 %v855, %v825
      %v857 = vadd.f32 %v856, %v826
      %v858 = vadd.f32 %v857, %v827
      %v859 = vadd.f32 %v858, %v828
      %v860 = vadd.f32 %v859, %v829
      %v861 = vadd.f32 %v860, %v830
      %v862 = vadd.f32 %v861, %v831
      %v863 = vadd.f32 %v862, %v832
      %v864 = vadd.f32 %v863, %v833
      %v865 = vadd.f32 %v864, %v834
      %v866 = vadd.f32 %v865, %v835
      %v867 = vadd.f32 %v866, %v836
      %v868 = vadd.f32 %v867, %v837
      %v869 = vadd.f32 %v868, %v838
      %v870 = vadd.f32 %v869, %v839
      %v871 = vadd.f32 %v870, %v840
      %v872 = vadd.f32 %v871, %v841
      %v873 = vadd.f32 %v872, %v842
      %v874 = vadd.f32 %v873, %v843
      %v875 = vadd.f32 %v874, %v844
      %v876 = vadd.f32 %v875, %v845
      %v877 = vadd.f32 %v876, %v846
      %v878 = vadd.f32 %v877, %v847
      %v879 = vadd.f32 %v878, %v848
      %v880 = vadd.f32 %v879, %v849
      %v881 = vadd.f32 %v880, %v850
      %v882 = vadd.f32 %v881, %v851
      %v883 = vrot.slane %v882, 4
      %v884 = vadd.f32 %v882, %v883
      %v885 = vrot.slane %v884, 2
      %v886 = vadd.f32 %v884, %v885
      %v887 = vrot.slane %v886, 1
      %v888 = vadd.f32 %v886, %v887
      %889 = vst [vmem:[%s274] sm:$0xff] %v888
      %s890 = smul.u32 32, %s20
      %p891 = scmp.lt.s32.totalorder %s890, 63
      %s892 = scalar_select %p891, %s890, 63
      %p893 = scmp.lt.s32.totalorder %s21, 0
      %s894 = scalar_select %p893, %s21, 0
      %s895 = sadd.s32 %s894, %s892
      %s896 = smul.addr %s895, 4
      %s897 = scalar_lea.vmem %s2, %s896
      %p898 = scmp.lt.s32.totalorder %s20, 1
      %s899 = scalar_select %p898, %s20, 1
      %p900 = scmp.lt.s32.totalorder %s21, 0
      %s901 = scalar_select %p900, %s21, 0
      %s902 = sadd.s32 %s901, %s899
      %s903 = smul.addr %s902, 8
      %s904 = scalar_lea.vmem %s3, %s903
      %p905 = scmp.lt.s32.totalorder %s20, 1
      %s906 = scalar_select %p905, %s20, 1
      %p907 = scmp.lt.s32.totalorder %s21, 0
      %s908 = scalar_select %p907, %s21, 0
      %s909 = sadd.s32 %s908, %s906
      %s910 = smul.addr %s909, 8
      %s911 = scalar_lea.vmem %s4, %s910
      // Predicated region
      $region29: #{basic_conv_forward.2} parent=27 // pred_check
        %p912 = pneg %p100
      $region30: #{basic_conv_forward.2} parent=27 // pred_check_branch
        %914 = sbr.rel (%p912) target = $region32
      $region31: #{basic_conv_forward.2} parent=27 // pred_region
        %s915 = smul.u32 32, %s20
      $region32: #{basic_conv_forward.2} parent=27 // pred_fallthru
        _
      // Predicated region
      $region33: #{basic_conv_forward.2} parent=27 // pred_check
        %p916 = pneg %p128
      $region34: #{basic_conv_forward.2} parent=27 // pred_check_branch
        %918 = sbr.rel (%p916) target = $region36
      $region35: #{basic_conv_forward.2} parent=27 // pred_region
        _
      $region36: #{basic_conv_forward.2} parent=27 // pred_fallthru
        _
      // Predicated region
      $region37: #{basic_conv_forward.2} parent=27 // pred_check
        %p919 = pneg %p156
      $region38: #{basic_conv_forward.2} parent=27 // pred_check_branch
        %921 = sbr.rel (%p919) target = $region40
      $region39: #{basic_conv_forward.2} parent=27 // pred_region
        _
      $region40: #{basic_conv_forward.2} parent=27 // pred_fallthru
        _
    $region28: #{basic_conv_forward.2} parent=5 // pred_fallthru
      _
    %p922 = scmp.le.s32.totalorder 2, %s11
    // Predicated region
    $region41: #{basic_conv_forward.2} parent=5 // pred_check
      %p923 = pneg %p922
    $region42: #{basic_conv_forward.2} parent=5 // pred_check_branch
      %925 = sbr.rel (%p923) target = $region44
    $region43: #{basic_conv_forward.2} parent=5 // pred_region
      %s926 = ssub.s32 %s11, 2
      // Predicated region
      $region45: #{basic_conv_forward.2} parent=43 // pred_check
        %p927 = pneg %p106
      $region46: #{basic_conv_forward.2} parent=43 // pred_check_branch
        %929 = sbr.rel (%p927) target = $region48
      $region47: #{basic_conv_forward.2} parent=43 // pred_region
        %s930 = smul.u32 32, %s22
        %p931 = scmp.lt.s32.totalorder %s930, 63
        %s932 = scalar_select %p931, %s930, 63
        %p933 = scmp.lt.s32.totalorder %s23, 0
        %s934 = scalar_select %p933, %s23, 0
        %s935 = sadd.s32 %s934, %s932
        %s936 = smul.addr %s935, 4
        %s937 = scalar_lea.vmem %s2, %s936
      $region48: #{basic_conv_forward.2} parent=43 // pred_fallthru
        _
      // Predicated region
      $region49: #{basic_conv_forward.2} parent=43 // pred_check
        %p938 = pneg %p134
      $region50: #{basic_conv_forward.2} parent=43 // pred_check_branch
        %940 = sbr.rel (%p938) target = $region52
      $region51: #{basic_conv_forward.2} parent=43 // pred_region
        %p941 = scmp.lt.s32.totalorder %s22, 1
        %s942 = scalar_select %p941, %s22, 1
        %p943 = scmp.lt.s32.totalorder %s23, 0
        %s944 = scalar_select %p943, %s23, 0
        %s945 = sadd.s32 %s944, %s942
        %s946 = smul.addr %s945, 8
        %s947 = scalar_lea.vmem %s3, %s946
      $region52: #{basic_conv_forward.2} parent=43 // pred_fallthru
        _
      // Predicated region
      $region53: #{basic_conv_forward.2} parent=43 // pred_check
        %p948 = pneg %p162
      $region54: #{basic_conv_forward.2} parent=43 // pred_check_branch
        %950 = sbr.rel (%p948) target = $region56
      $region55: #{basic_conv_forward.2} parent=43 // pred_region
        %p951 = scmp.lt.s32.totalorder %s22, 1
        %s952 = scalar_select %p951, %s22, 1
        %p953 = scmp.lt.s32.totalorder %s23, 0
        %s954 = scalar_select %p953, %s23, 0
        %s955 = sadd.s32 %s954, %s952
        %s956 = smul.addr %s955, 8
        %s957 = scalar_lea.vmem %s4, %s956
      $region56: #{basic_conv_forward.2} parent=43 // pred_fallthru
        _
    $region44: #{basic_conv_forward.2} parent=5 // pred_fallthru
      _
  $region6: #{basic_conv_forward.2} parent=0 // loop_footer
    %s15 = sadd.s32 1, %s11
  $region7: #{basic_conv_forward.2} parent=0 // loop_footer_branch
    %10 = sbr.rel target = $region3
  $region8: #{basic_conv_forward.2} parent=0 // loop_exit
    _

</llo_original>
